<compile_context>
chip_gen: v7x
topology: tpu7x:2x2x1
jax: 0.10.0
libtpu: 0.0.40
codegen_flags: <defaults>
</compile_context>

<pallas_src>
import numpy as np
import jax
import jax.numpy as jnp
from jax.experimental import pallas as pl
from jax.experimental.pallas import tpu as pltpu

K_IN = 2080            # fc1 input features
F_OUT = 256            # fc1 output features / BatchNorm1d features
EPS = 1e-5             # PyTorch BatchNorm eps
NEG_SLOPE = 0.01       # PyTorch LeakyReLU default negative_slope


# ----------------------------------------------------------------------------
# Fused kernel: fc1 matmul + bias + LeakyReLU (+ dropout = identity, eval)
#               + folded BatchNorm1d affine.  One MXU op, few VPU ops.
#   x_ref : (tm, K)   f32   row tile of the input
#   w_ref : (K, F)    f32   fc1 weight, transposed to (in, out)
#   b_ref : (1, F)    f32   fc1 bias
#   s_ref : (1, F)    f32   BN scale = gamma / sqrt(running_var + eps)
#   t_ref : (1, F)    f32   BN shift = beta - running_mean * scale
#   o_ref : (tm, F)   f32
# ----------------------------------------------------------------------------
def fc_leaky_bn_kernel(x_ref, w_ref, b_ref, s_ref, t_ref, o_ref):
    h = jnp.dot(x_ref[...], w_ref[...],
                preferred_element_type=jnp.float32) + b_ref[...]
    h = jnp.where(h >= 0.0, h, NEG_SLOPE * h)        # LeakyReLU; dropout = identity
    o_ref[...] = h * s_ref[...] + t_ref[...]         # BN1d (eval) folded affine


# ----------------------------------------------------------------------------
# Wrapper.  Small batches: one grid step with everything resident (~2.5 MB).
# Large batches: tile rows in multiples of 8 (block_rows), mark the row axis
# "parallel" for megacore sharding; weight/bias/BN blocks are grid-invariant.
# ----------------------------------------------------------------------------
def fc_leaky_bn(x, w_k, b, s, t, *, block_rows=256):
    n, k_dim = x.shape
    f = w_k.shape[1]

    if n <= block_rows:
        tm, n_pad = n, n                       # single block, no padding needed
    else:
        tm = block_rows                        # multiple of 8 (sublane aligned)
        n_pad = ((n + tm - 1) // tm) * tm

    x_p = x if n_pad == n else jnp.pad(x, ((0, n_pad - n), (0, 0)))

    out = pl.pallas_call(
        fc_leaky_bn_kernel,
        out_shape=jax.ShapeDtypeStruct((n_pad, f), jnp.float32),
        grid=(n_pad // tm,),
        in_specs=[
            pl.BlockSpec((tm, k_dim), lambda i: (i, 0)),   # input row tile
            pl.BlockSpec((k_dim, f), lambda i: (0, 0)),    # weight (resident)
            pl.BlockSpec((1, f), lambda i: (0, 0)),        # bias
            pl.BlockSpec((1, f), lambda i: (0, 0)),        # BN scale
            pl.BlockSpec((1, f), lambda i: (0, 0)),        # BN shift
        ],
        out_specs=pl.BlockSpec((tm, f), lambda i: (i, 0)),
        compiler_params=pltpu.CompilerParams(
            dimension_semantics=("parallel",),
            vmem_limit_bytes=32 * 1024 * 1024),   # actual need << 32 MB (v7x-safe)
    )(x_p, w_k, b, s, t)

    return out[:n] if n_pad != n else out


def _jax_reference(x, w_fc1, b_fc1, g1, be1, m1, v1):
    h = x @ w_fc1.T + b_fc1
    h = jnp.where(h >= 0.0, h, NEG_SLOPE * h)          # LeakyReLU; dropout identity
    return (h - m1) / jnp.sqrt(v1 + EPS) * g1 + be1    # BatchNorm1d (eval)


if __name__ == "__main__":
    # Shapes consistent with the module: input (N, 2080) -> (N, 256).
    N_SMALL = 8
    N_TILED = 300          # exercises the padded / row-tiled path

    key = jax.random.PRNGKey(0)
    ks = jax.random.split(key, 8)

    # Linear(2080, 256) params (PyTorch-like uniform init, deterministic)
    lb = 1.0 / np.sqrt(K_IN)
    w_fc1 = jax.random.uniform(ks[1], (F_OUT, K_IN), jnp.float32, -lb, lb)
    b_fc1 = jax.random.uniform(ks[2], (F_OUT,), jnp.float32, -lb, lb)

    # BatchNorm1d(256) params / running stats (eval mode)
    g1 = 1.0 + 0.1 * jax.random.normal(ks[3], (F_OUT,), jnp.float32)
    be1 = 0.1 * jax.random.normal(ks[4], (F_OUT,), jnp.float32)
    m1 = 0.1 * jax.random.normal(ks[5], (F_OUT,), jnp.float32)
    v1 = 1.0 + 0.5 * jax.random.uniform(ks[6], (F_OUT,), jnp.float32)

    # Fold BN into per-feature affine (host, float64 for accuracy); transpose
    # fc1 weight to (in, out) once so the kernel feeds the MXU directly.
    s1_64 = np.asarray(g1, np.float64) / np.sqrt(np.asarray(v1, np.float64) + EPS)
    t1_64 = np.asarray(be1, np.float64) - np.asarray(m1, np.float64) * s1_64
    s1 = jnp.asarray(s1_64, jnp.float32)
    t1 = jnp.asarray(t1_64, jnp.float32)
    w_fc1_k = w_fc1.T                                    # (2080, 256)

    @jax.jit
    def forward(x_in):
        return fc_leaky_bn(x_in, w_fc1_k, b_fc1[None, :], s1[None, :], t1[None, :])

    # --- small-batch path -----------------------------------------------------
    x_small = jax.random.normal(ks[0], (N_SMALL, K_IN), dtype=jnp.float32)
    out_small = jax.block_until_ready(forward(x_small))
    ref_small = _jax_reference(x_small, w_fc1, b_fc1, g1, be1, m1, v1)
    assert out_small.shape == (N_SMALL, F_OUT), out_small.shape
    np.testing.assert_allclose(np.asarray(out_small), np.asarray(ref_small),
                               rtol=1e-4, atol=1e-4)

    # --- row-tiled (padded) path ----------------------------------------------
    x_big = jax.random.normal(ks[7], (N_TILED, K_IN), dtype=jnp.float32)
    out_big = jax.block_until_ready(forward(x_big))
    ref_big = _jax_reference(x_big, w_fc1, b_fc1, g1, be1, m1, v1)
    assert out_big.shape == (N_TILED, F_OUT), out_big.shape
    np.testing.assert_allclose(np.asarray(out_big), np.asarray(ref_big),
                               rtol=1e-4, atol=1e-4)

    print("KERNEL_OK")
</pallas_src>

<mosaic_0001>
module attributes {stable_mosaic.version = 11 : i64} {
  func.func @fc_leaky_bn_kernel(%arg0: i32, %arg1: memref<8x2080xf32, #tpu.memory_space<vmem>>, %arg2: memref<2080x256xf32, #tpu.memory_space<vmem>>, %arg3: memref<1x256xf32, #tpu.memory_space<vmem>>, %arg4: memref<1x256xf32, #tpu.memory_space<vmem>>, %arg5: memref<1x256xf32, #tpu.memory_space<vmem>>, %arg6: memref<8x256xf32, #tpu.memory_space<vmem>>) attributes {dimension_semantics = [#tpu.dimension_semantics<parallel>], iteration_bounds = array<i64: 1>, scalar_prefetch = 0 : i64, scratch_operands = 0 : i64, tpu.core_type = #tpu.core_type<tc>, window_params = [{transform_indices = @transform_0, window_bounds = array<i64: 8, 2080>}, {pipeline_mode = #tpu.pipeline_mode<synchronous>, transform_indices = @transform_1, window_bounds = array<i64: 2080, 256>}, {pipeline_mode = #tpu.pipeline_mode<synchronous>, transform_indices = @transform_2, window_bounds = array<i64: 1, 256>}, {pipeline_mode = #tpu.pipeline_mode<synchronous>, transform_indices = @transform_3, window_bounds = array<i64: 1, 256>}, {pipeline_mode = #tpu.pipeline_mode<synchronous>, transform_indices = @transform_4, window_bounds = array<i64: 1, 256>}, {transform_indices = @transform_5, window_bounds = array<i64: 8, 256>}]} {
    %c0 = arith.constant 0 : index
    %c0_0 = arith.constant 0 : index
    %0 = vector.load %arg1[%c0, %c0_0] : memref<8x2080xf32, #tpu.memory_space<vmem>>, vector<8x2080xf32>
    %c0_1 = arith.constant 0 : index
    %c0_2 = arith.constant 0 : index
    %1 = vector.load %arg2[%c0_1, %c0_2] : memref<2080x256xf32, #tpu.memory_space<vmem>>, vector<2080x256xf32>
    %cst = arith.constant dense<0.000000e+00> : vector<8x256xf32>
    %2 = tpu.matmul %0, %1, %cst {dimension_numbers = #tpu.dot_dimension_numbers<[1], [0], [0], [1], [0, 0, 1, 1], [], []>} : vector<8x2080xf32>, vector<2080x256xf32>, vector<8x256xf32> -> vector<8x256xf32>
    %c0_3 = arith.constant 0 : index
    %c0_4 = arith.constant 0 : index
    %3 = vector.load %arg3[%c0_3, %c0_4] : memref<1x256xf32, #tpu.memory_space<vmem>>, vector<1x256xf32>
    %4 = vector.broadcast %3 : vector<1x256xf32> to vector<8x256xf32>
    %5 = arith.addf %2, %4 : vector<8x256xf32>
    %cst_5 = arith.constant 0.000000e+00 : f32
    %6 = vector.broadcast %cst_5 : f32 to vector<8x256xf32>
    %7 = arith.cmpf oge, %5, %6 : vector<8x256xf32>
    %cst_6 = arith.constant 0.00999999977 : f32
    %8 = vector.broadcast %cst_6 : f32 to vector<8x256xf32>
    %9 = arith.mulf %8, %5 : vector<8x256xf32>
    %10 = arith.select %7, %5, %9 : vector<8x256xi1>, vector<8x256xf32>
    %c0_7 = arith.constant 0 : index
    %c0_8 = arith.constant 0 : index
    %11 = vector.load %arg4[%c0_7, %c0_8] : memref<1x256xf32, #tpu.memory_space<vmem>>, vector<1x256xf32>
    %12 = vector.broadcast %11 : vector<1x256xf32> to vector<8x256xf32>
    %13 = arith.mulf %10, %12 : vector<8x256xf32>
    %c0_9 = arith.constant 0 : index
    %c0_10 = arith.constant 0 : index
    %14 = vector.load %arg5[%c0_9, %c0_10] : memref<1x256xf32, #tpu.memory_space<vmem>>, vector<1x256xf32>
    %15 = vector.broadcast %14 : vector<1x256xf32> to vector<8x256xf32>
    %16 = arith.addf %13, %15 : vector<8x256xf32>
    %c0_11 = arith.constant 0 : index
    %c0_12 = arith.constant 0 : index
    %17 = vector.load %arg6[%c0_11, %c0_12] : memref<8x256xf32, #tpu.memory_space<vmem>>, vector<8x256xf32>
    tpu.vector_store %arg6[%c0_11, %c0_12], %16 {strides = array<i32>} : memref<8x256xf32, #tpu.memory_space<vmem>>, vector<8x256xf32>,
    return
  }
  func.func @transform_0(%arg0: i32) -> (i32, i32) {
    %c0_i32 = arith.constant 0 : i32
    %c0_i32_0 = arith.constant 0 : i32
    return %arg0, %c0_i32 : i32, i32
  }
  func.func @transform_1(%arg0: i32) -> (i32, i32) {
    %c0_i32 = arith.constant 0 : i32
    %c0_i32_0 = arith.constant 0 : i32
    %c0_i32_1 = arith.constant 0 : i32
    return %c0_i32, %c0_i32_0 : i32, i32
  }
  func.func @transform_2(%arg0: i32) -> (i32, i32) {
    %c0_i32 = arith.constant 0 : i32
    %c0_i32_0 = arith.constant 0 : i32
    %c0_i32_1 = arith.constant 0 : i32
    return %c0_i32, %c0_i32_0 : i32, i32
  }
  func.func @transform_3(%arg0: i32) -> (i32, i32) {
    %c0_i32 = arith.constant 0 : i32
    %c0_i32_0 = arith.constant 0 : i32
    %c0_i32_1 = arith.constant 0 : i32
    return %c0_i32, %c0_i32_0 : i32, i32
  }
  func.func @transform_4(%arg0: i32) -> (i32, i32) {
    %c0_i32 = arith.constant 0 : i32
    %c0_i32_0 = arith.constant 0 : i32
    %c0_i32_1 = arith.constant 0 : i32
    return %c0_i32, %c0_i32_0 : i32, i32
  }
  func.func @transform_5(%arg0: i32) -> (i32, i32) {
    %c0_i32 = arith.constant 0 : i32
    %c0_i32_0 = arith.constant 0 : i32
    return %arg0, %c0_i32 : i32, i32
  }
}

</mosaic_0001>

<llo_original>
// kernel: forward.1
$region0: #{forward.1}
  #allocation0 [shape = 'u32[]', space=smem, size = 0x4, offset = 0x4, fixed_abs, tag = 'smem constant byte address 0x4 - core index']
  #allocation1 [shape = 'u32[144,128]{1,0:T(1,128)}', space=vmem, size = 0x12000, scoped, tag = 'internal scratch']
  %s0 = inlined_call_operand.hbm [shape: f32[8,2080], index: 0, kind: input, shape index: {}]
  %s1 = inlined_call_operand.hbm [shape: f32[2080,256], index: 1, kind: input, shape index: {}]
  %s2 = inlined_call_operand.hbm [shape: f32[1,256], index: 2, kind: input, shape index: {}]
  %s3 = inlined_call_operand.hbm [shape: f32[1,256], index: 3, kind: input, shape index: {}]
  %s4 = inlined_call_operand.hbm [shape: f32[1,256], index: 4, kind: input, shape index: {}]
  %s5 = inlined_call_operand.hbm [shape: f32[8,256], index: 5, kind: output, shape index: {}]
  %s6 = sld [smem:[#allocation0]]
  $region50: #{forward.1} parent=0
    _
  %s8 = ssub.s32 1, %s6
  %s9 = scalar_select 0, %s8, %s6
  $region1: #{forward.1} parent=0
    #allocation2 [shape = 'u8[69632]{0}', space=vmem, size = 0x11000, scoped, tag = 'input window, operand 0, single buffered']
    #allocation3 [shape = 's32[1]{0}', space=sflag, size = 0x4, scoped, tag = 'scoped memory for forward.1']
    #allocation4 [shape = 's32[1]{0}', space=sflag, size = 0x4, scoped, tag = 'scoped memory for forward.1']
    #allocation5 [shape = 'u8[2129920]{0}', space=vmem, size = 0x208000, scoped, tag = 'input window, operand 1, single buffered']
    #allocation6 [shape = 's32[1]{0}', space=sflag, size = 0x4, scoped, tag = 'scoped memory for forward.1']
    #allocation7 [shape = 'u8[1024]{0}', space=vmem, size = 0x400, scoped, tag = 'input window, operand 2, single buffered']
    #allocation8 [shape = 'u8[1024]{0}', space=vmem, size = 0x400, scoped, tag = 'input window, operand 3, single buffered']
    #allocation9 [shape = 's32[1]{0}', space=sflag, size = 0x4, scoped, tag = 'scoped memory for forward.1']
    #allocation10 [shape = 'u8[1024]{0}', space=vmem, size = 0x400, scoped, tag = 'input window, operand 4, single buffered']
    #allocation11 [shape = 'u8[8192]{0}', space=vmem, size = 0x2000, scoped, tag = 'output window, operand 0, single buffered']
    %10 = vsyncpa [#allocation3], 0
    %11 = vsyncpa [#allocation6], 0
    %12 = vsyncpa [#allocation9], 0
    %13 = vsyncpa [#allocation4], 0
    // Predicated region
    $region2: #{forward.1} parent=1 // pred_check
      _
    $region3: #{forward.1} parent=1 // pred_check_branch
      %15 = sbr.rel (0) target = $region5
    $region4: #{forward.1} parent=1 // pred_region
      %s17 = ssub.s32 2176, 2176
      %18 = vsyncadd [#allocation3], %s17
      %s20 = sshll.u32 [#allocation2], 4
      %s21 = int_to_ptr.vmem [resolvable:$true] %s20
      %23 = dma.hbm_to_vmem [thread:$0]  %s0, 2176, %s21, [#allocation3]
    $region5: #{forward.1} parent=1 // pred_fallthru
      _
    // Predicated region
    $region6: #{forward.1} parent=1 // pred_check
      _
    $region7: #{forward.1} parent=1 // pred_check_branch
      %25 = sbr.rel (0) target = $region9
    $region8: #{forward.1} parent=1 // pred_region
      %s27 = ssub.s32 66560, 66560
      %28 = vsyncadd [#allocation6], %s27
      %s29 = sshll.u32 [#allocation5], 4
      %s30 = int_to_ptr.vmem [resolvable:$true] %s29
      %35 = dma.hbm_to_vmem [thread:$0]  %s1, 66560, %s30, [#allocation6], 256, 256, 16
    $region9: #{forward.1} parent=1 // pred_fallthru
      _
    // Predicated region
    $region10: #{forward.1} parent=1 // pred_check
      _
    $region11: #{forward.1} parent=1 // pred_check_branch
      %37 = sbr.rel (0) target = $region13
    $region12: #{forward.1} parent=1 // pred_region
      %s39 = ssub.s32 32, 32
      %40 = vsyncadd [#allocation6], %s39
      %s42 = sshll.u32 [#allocation7], 4
      %s43 = int_to_ptr.vmem [resolvable:$true] %s42
      %45 = dma.hbm_to_vmem [thread:$0]  %s2, 32, %s43, [#allocation6]
    $region13: #{forward.1} parent=1 // pred_fallthru
      _
    // Predicated region
    $region14: #{forward.1} parent=1 // pred_check
      _
    $region15: #{forward.1} parent=1 // pred_check_branch
      %47 = sbr.rel (0) target = $region17
    $region16: #{forward.1} parent=1 // pred_region
      %s49 = ssub.s32 32, 32
      %50 = vsyncadd [#allocation9], %s49
      %s52 = sshll.u32 [#allocation8], 4
      %s53 = int_to_ptr.vmem [resolvable:$true] %s52
      %55 = dma.hbm_to_vmem [thread:$0]  %s3, 32, %s53, [#allocation9]
    $region17: #{forward.1} parent=1 // pred_fallthru
      _
    // Predicated region
    $region18: #{forward.1} parent=1 // pred_check
      _
    $region19: #{forward.1} parent=1 // pred_check_branch
      %57 = sbr.rel (0) target = $region21
    $region20: #{forward.1} parent=1 // pred_region
      %s59 = ssub.s32 32, 32
      %60 = vsyncadd [#allocation9], %s59
      %s62 = sshll.u32 [#allocation10], 4
      %s63 = int_to_ptr.vmem [resolvable:$true] %s62
      %65 = dma.hbm_to_vmem [thread:$0]  %s4, 32, %s63, [#allocation9]
    $region21: #{forward.1} parent=1 // pred_fallthru
      _
    // Predicated region
    $region22: #{forward.1} parent=1 // pred_check
      _
    $region23: #{forward.1} parent=1 // pred_check_branch
      %67 = sbr.rel (0) target = $region25
    $region24: #{forward.1} parent=1 // pred_region
      %68 = dma.done [#allocation3], 2176
    $region25: #{forward.1} parent=1 // pred_fallthru
      _
    // Predicated region
    $region26: #{forward.1} parent=1 // pred_check
      _
    $region27: #{forward.1} parent=1 // pred_check_branch
      %70 = sbr.rel (0) target = $region29
    $region28: #{forward.1} parent=1 // pred_region
      %71 = dma.done [#allocation6], 66560
    $region29: #{forward.1} parent=1 // pred_fallthru
      _
    // Predicated region
    $region30: #{forward.1} parent=1 // pred_check
      _
    $region31: #{forward.1} parent=1 // pred_check_branch
      %73 = sbr.rel (0) target = $region33
    $region32: #{forward.1} parent=1 // pred_region
      %74 = dma.done [#allocation6], 32
    $region33: #{forward.1} parent=1 // pred_fallthru
      _
    // Predicated region
    $region34: #{forward.1} parent=1 // pred_check
      _
    $region35: #{forward.1} parent=1 // pred_check_branch
      %76 = sbr.rel (0) target = $region37
    $region36: #{forward.1} parent=1 // pred_region
      %77 = dma.done [#allocation9], 32
    $region37: #{forward.1} parent=1 // pred_fallthru
      _
    // Predicated region
    $region38: #{forward.1} parent=1 // pred_check
      _
    $region39: #{forward.1} parent=1 // pred_check_branch
      %79 = sbr.rel (0) target = $region41
    $region40: #{forward.1} parent=1 // pred_region
      %80 = dma.done [#allocation9], 32
    $region41: #{forward.1} parent=1 // pred_fallthru
      _
    %v81 = vld [vmem:[#allocation2] sm:$0xff]
    %v82 = vld [vmem:[#allocation2 + $0x8] sm:$0xff]
    %v83 = vld [vmem:[#allocation2 + $0x10] sm:$0xff]
    %v84 = vld [vmem:[#allocation2 + $0x18] sm:$0xff]
    %v85 = vld [vmem:[#allocation2 + $0x20] sm:$0xff]
    %v86 = vld [vmem:[#allocation2 + $0x28] sm:$0xff]
    %v87 = vld [vmem:[#allocation2 + $0x30] sm:$0xff]
    %v88 = vld [vmem:[#allocation2 + $0x38] sm:$0xff]
    %v89 = vld [vmem:[#allocation2 + $0x40] sm:$0xff]
    %v90 = vld [vmem:[#allocation2 + $0x48] sm:$0xff]
    %v91 = vld [vmem:[#allocation2 + $0x50] sm:$0xff]
    %v92 = vld [vmem:[#allocation2 + $0x58] sm:$0xff]
    %v93 = vld [vmem:[#allocation2 + $0x60] sm:$0xff]
    %v94 = vld [vmem:[#allocation2 + $0x68] sm:$0xff]
    %v95 = vld [vmem:[#allocation2 + $0x70] sm:$0xff]
    %v96 = vld [vmem:[#allocation2 + $0x78] sm:$0xff]
    %v97 = vld [vmem:[#allocation2 + $0x80] sm:$0xff]
    %v98 = vld [vmem:[#allocation5] sm:$0xff]
    %v99 = vld [vmem:[#allocation5 + $0x8] sm:$0xff]
    %v100 = vld [vmem:[#allocation5 + $0x10] sm:$0xff]
    %v101 = vld [vmem:[#allocation5 + $0x18] sm:$0xff]
    %v102 = vld [vmem:[#allocation5 + $0x20] sm:$0xff]
    %v103 = vld [vmem:[#allocation5 + $0x28] sm:$0xff]
    %v104 = vld [vmem:[#allocation5 + $0x30] sm:$0xff]
    %v105 = vld [vmem:[#allocation5 + $0x38] sm:$0xff]
    %v106 = vld [vmem:[#allocation5 + $0x40] sm:$0xff]
    %v107 = vld [vmem:[#allocation5 + $0x48] sm:$0xff]
    %v108 = vld [vmem:[#allocation5 + $0x50] sm:$0xff]
    %v109 = vld [vmem:[#allocation5 + $0x58] sm:$0xff]
    %v110 = vld [vmem:[#allocation5 + $0x60] sm:$0xff]
    %v111 = vld [vmem:[#allocation5 + $0x68] sm:$0xff]
    %v112 = vld [vmem:[#allocation5 + $0x70] sm:$0xff]
    %v113 = vld [vmem:[#allocation5 + $0x78] sm:$0xff]
    %v114 = vld [vmem:[#allocation5 + $0x80] sm:$0xff]
    %v115 = vld [vmem:[#allocation5 + $0x88] sm:$0xff]
    %v116 = vld [vmem:[#allocation5 + $0x90] sm:$0xff]
    %v117 = vld [vmem:[#allocation5 + $0x98] sm:$0xff]
    %v118 = vld [vmem:[#allocation5 + $0xa0] sm:$0xff]
    %v119 = vld [vmem:[#allocation5 + $0xa8] sm:$0xff]
    %v120 = vld [vmem:[#allocation5 + $0xb0] sm:$0xff]
    %v121 = vld [vmem:[#allocation5 + $0xb8] sm:$0xff]
    %v122 = vld [vmem:[#allocation5 + $0xc0] sm:$0xff]
    %v123 = vld [vmem:[#allocation5 + $0xc8] sm:$0xff]
    %v124 = vld [vmem:[#allocation5 + $0xd0] sm:$0xff]
    %v125 = vld [vmem:[#allocation5 + $0xd8] sm:$0xff]
    %v126 = vld [vmem:[#allocation5 + $0xe0] sm:$0xff]
    %v127 = vld [vmem:[#allocation5 + $0xe8] sm:$0xff]
    %v128 = vld [vmem:[#allocation5 + $0xf0] sm:$0xff]
    %v129 = vld [vmem:[#allocation5 + $0xf8] sm:$0xff]
    %v130 = vld [vmem:[#allocation5 + $0x100] sm:$0xff]
    %v131 = vld [vmem:[#allocation5 + $0x108] sm:$0xff]
    %v132 = vld [vmem:[#allocation5 + $0x110] sm:$0xff]
    %v133 = vld [vmem:[#allocation5 + $0x118] sm:$0xff]
    %v134 = vld [vmem:[#allocation5 + $0x120] sm:$0xff]
    %v135 = vld [vmem:[#allocation5 + $0x128] sm:$0xff]
    %v136 = vld [vmem:[#allocation5 + $0x130] sm:$0xff]
    %v137 = vld [vmem:[#allocation5 + $0x138] sm:$0xff]
    %v138 = vld [vmem:[#allocation5 + $0x140] sm:$0xff]
    %v139 = vld [vmem:[#allocation5 + $0x148] sm:$0xff]
    %v140 = vld [vmem:[#allocation5 + $0x150] sm:$0xff]
    %v141 = vld [vmem:[#allocation5 + $0x158] sm:$0xff]
    %v142 = vld [vmem:[#allocation5 + $0x160] sm:$0xff]
    %v143 = vld [vmem:[#allocation5 + $0x168] sm:$0xff]
    %v144 = vld [vmem:[#allocation5 + $0x170] sm:$0xff]
    %v145 = vld [vmem:[#allocation5 + $0x178] sm:$0xff]
    %v146 = vld [vmem:[#allocation5 + $0x180] sm:$0xff]
    %v147 = vld [vmem:[#allocation5 + $0x188] sm:$0xff]
    %v148 = vld [vmem:[#allocation5 + $0x190] sm:$0xff]
    %v149 = vld [vmem:[#allocation5 + $0x198] sm:$0xff]
    %v150 = vld [vmem:[#allocation5 + $0x1a0] sm:$0xff]
    %v151 = vld [vmem:[#allocation5 + $0x1a8] sm:$0xff]
    %v152 = vld [vmem:[#allocation5 + $0x1b0] sm:$0xff]
    %v153 = vld [vmem:[#allocation5 + $0x1b8] sm:$0xff]
    %v154 = vld [vmem:[#allocation5 + $0x1c0] sm:$0xff]
    %v155 = vld [vmem:[#allocation5 + $0x1c8] sm:$0xff]
    %v156 = vld [vmem:[#allocation5 + $0x1d0] sm:$0xff]
    %v157 = vld [vmem:[#allocation5 + $0x1d8] sm:$0xff]
    %v158 = vld [vmem:[#allocation5 + $0x1e0] sm:$0xff]
    %v159 = vld [vmem:[#allocation5 + $0x1e8] sm:$0xff]
    %v160 = vld [vmem:[#allocation5 + $0x1f0] sm:$0xff]
    %v161 = vld [vmem:[#allocation5 + $0x1f8] sm:$0xff]
    %v162 = vld [vmem:[#allocation5 + $0x200] sm:$0xff]
    %v163 = vld [vmem:[#allocation5 + $0x208] sm:$0xff]
    %v164 = vld [vmem:[#allocation5 + $0x210] sm:$0xff]
    %v165 = vld [vmem:[#allocation5 + $0x218] sm:$0xff]
    %v166 = vld [vmem:[#allocation5 + $0x220] sm:$0xff]
    %v167 = vld [vmem:[#allocation5 + $0x228] sm:$0xff]
    %v168 = vld [vmem:[#allocation5 + $0x230] sm:$0xff]
    %v169 = vld [vmem:[#allocation5 + $0x238] sm:$0xff]
    %v170 = vld [vmem:[#allocation5 + $0x240] sm:$0xff]
    %v171 = vld [vmem:[#allocation5 + $0x248] sm:$0xff]
    %v172 = vld [vmem:[#allocation5 + $0x250] sm:$0xff]
    %v173 = vld [vmem:[#allocation5 + $0x258] sm:$0xff]
    %v174 = vld [vmem:[#allocation5 + $0x260] sm:$0xff]
    %v175 = vld [vmem:[#allocation5 + $0x268] sm:$0xff]
    %v176 = vld [vmem:[#allocation5 + $0x270] sm:$0xff]
    %v177 = vld [vmem:[#allocation5 + $0x278] sm:$0xff]
    %v178 = vld [vmem:[#allocation5 + $0x280] sm:$0xff]
    %v179 = vld [vmem:[#allocation5 + $0x288] sm:$0xff]
    %v180 = vld [vmem:[#allocation5 + $0x290] sm:$0xff]
    %v181 = vld [vmem:[#allocation5 + $0x298] sm:$0xff]
    %v182 = vld [vmem:[#allocation5 + $0x2a0] sm:$0xff]
    %v183 = vld [vmem:[#allocation5 + $0x2a8] sm:$0xff]
    %v184 = vld [vmem:[#allocation5 + $0x2b0] sm:$0xff]
    %v185 = vld [vmem:[#allocation5 + $0x2b8] sm:$0xff]
    %v186 = vld [vmem:[#allocation5 + $0x2c0] sm:$0xff]
    %v187 = vld [vmem:[#allocation5 + $0x2c8] sm:$0xff]
    %v188 = vld [vmem:[#allocation5 + $0x2d0] sm:$0xff]
    %v189 = vld [vmem:[#allocation5 + $0x2d8] sm:$0xff]
    %v190 = vld [vmem:[#allocation5 + $0x2e0] sm:$0xff]
    %v191 = vld [vmem:[#allocation5 + $0x2e8] sm:$0xff]
    %v192 = vld [vmem:[#allocation5 + $0x2f0] sm:$0xff]
    %v193 = vld [vmem:[#allocation5 + $0x2f8] sm:$0xff]
    %v194 = vld [vmem:[#allocation5 + $0x300] sm:$0xff]
    %v195 = vld [vmem:[#allocation5 + $0x308] sm:$0xff]
    %v196 = vld [vmem:[#allocation5 + $0x310] sm:$0xff]
    %v197 = vld [vmem:[#allocation5 + $0x318] sm:$0xff]
    %v198 = vld [vmem:[#allocation5 + $0x320] sm:$0xff]
    %v199 = vld [vmem:[#allocation5 + $0x328] sm:$0xff]
    %v200 = vld [vmem:[#allocation5 + $0x330] sm:$0xff]
    %v201 = vld [vmem:[#allocation5 + $0x338] sm:$0xff]
    %v202 = vld [vmem:[#allocation5 + $0x340] sm:$0xff]
    %v203 = vld [vmem:[#allocation5 + $0x348] sm:$0xff]
    %v204 = vld [vmem:[#allocation5 + $0x350] sm:$0xff]
    %v205 = vld [vmem:[#allocation5 + $0x358] sm:$0xff]
    %v206 = vld [vmem:[#allocation5 + $0x360] sm:$0xff]
    %v207 = vld [vmem:[#allocation5 + $0x368] sm:$0xff]
    %v208 = vld [vmem:[#allocation5 + $0x370] sm:$0xff]
    %v209 = vld [vmem:[#allocation5 + $0x378] sm:$0xff]
    %v210 = vld [vmem:[#allocation5 + $0x380] sm:$0xff]
    %v211 = vld [vmem:[#allocation5 + $0x388] sm:$0xff]
    %v212 = vld [vmem:[#allocation5 + $0x390] sm:$0xff]
    %v213 = vld [vmem:[#allocation5 + $0x398] sm:$0xff]
    %v214 = vld [vmem:[#allocation5 + $0x3a0] sm:$0xff]
    %v215 = vld [vmem:[#allocation5 + $0x3a8] sm:$0xff]
    %v216 = vld [vmem:[#allocation5 + $0x3b0] sm:$0xff]
    %v217 = vld [vmem:[#allocation5 + $0x3b8] sm:$0xff]
    %v218 = vld [vmem:[#allocation5 + $0x3c0] sm:$0xff]
    %v219 = vld [vmem:[#allocation5 + $0x3c8] sm:$0xff]
    %v220 = vld [vmem:[#allocation5 + $0x3d0] sm:$0xff]
    %v221 = vld [vmem:[#allocation5 + $0x3d8] sm:$0xff]
    %v222 = vld [vmem:[#allocation5 + $0x3e0] sm:$0xff]
    %v223 = vld [vmem:[#allocation5 + $0x3e8] sm:$0xff]
    %v224 = vld [vmem:[#allocation5 + $0x3f0] sm:$0xff]
    %v225 = vld [vmem:[#allocation5 + $0x3f8] sm:$0xff]
    %v226 = vld [vmem:[#allocation5 + $0x400] sm:$0xff]
    %v227 = vld [vmem:[#allocation5 + $0x408] sm:$0xff]
    %v228 = vld [vmem:[#allocation5 + $0x410] sm:$0xff]
    %v229 = vld [vmem:[#allocation5 + $0x418] sm:$0xff]
    %v230 = vld [vmem:[#allocation5 + $0x420] sm:$0xff]
    %v231 = vld [vmem:[#allocation5 + $0x428] sm:$0xff]
    %v232 = vld [vmem:[#allocation5 + $0x430] sm:$0xff]
    %v233 = vld [vmem:[#allocation5 + $0x438] sm:$0xff]
    %v234 = vld [vmem:[#allocation5 + $0x440] sm:$0xff]
    %v235 = vld [vmem:[#allocation5 + $0x448] sm:$0xff]
    %v236 = vld [vmem:[#allocation5 + $0x450] sm:$0xff]
    %v237 = vld [vmem:[#allocation5 + $0x458] sm:$0xff]
    %v238 = vld [vmem:[#allocation5 + $0x460] sm:$0xff]
    %v239 = vld [vmem:[#allocation5 + $0x468] sm:$0xff]
    %v240 = vld [vmem:[#allocation5 + $0x470] sm:$0xff]
    %v241 = vld [vmem:[#allocation5 + $0x478] sm:$0xff]
    %v242 = vld [vmem:[#allocation5 + $0x480] sm:$0xff]
    %v243 = vld [vmem:[#allocation5 + $0x488] sm:$0xff]
    %v244 = vld [vmem:[#allocation5 + $0x490] sm:$0xff]
    %v245 = vld [vmem:[#allocation5 + $0x498] sm:$0xff]
    %v246 = vld [vmem:[#allocation5 + $0x4a0] sm:$0xff]
    %v247 = vld [vmem:[#allocation5 + $0x4a8] sm:$0xff]
    %v248 = vld [vmem:[#allocation5 + $0x4b0] sm:$0xff]
    %v249 = vld [vmem:[#allocation5 + $0x4b8] sm:$0xff]
    %v250 = vld [vmem:[#allocation5 + $0x4c0] sm:$0xff]
    %v251 = vld [vmem:[#allocation5 + $0x4c8] sm:$0xff]
    %v252 = vld [vmem:[#allocation5 + $0x4d0] sm:$0xff]
    %v253 = vld [vmem:[#allocation5 + $0x4d8] sm:$0xff]
    %v254 = vld [vmem:[#allocation5 + $0x4e0] sm:$0xff]
    %v255 = vld [vmem:[#allocation5 + $0x4e8] sm:$0xff]
    %v256 = vld [vmem:[#allocation5 + $0x4f0] sm:$0xff]
    %v257 = vld [vmem:[#allocation5 + $0x4f8] sm:$0xff]
    %v258 = vld [vmem:[#allocation5 + $0x500] sm:$0xff]
    %v259 = vld [vmem:[#allocation5 + $0x508] sm:$0xff]
    %v260 = vld [vmem:[#allocation5 + $0x510] sm:$0xff]
    %v261 = vld [vmem:[#allocation5 + $0x518] sm:$0xff]
    %v262 = vld [vmem:[#allocation5 + $0x520] sm:$0xff]
    %v263 = vld [vmem:[#allocation5 + $0x528] sm:$0xff]
    %v264 = vld [vmem:[#allocation5 + $0x530] sm:$0xff]
    %v265 = vld [vmem:[#allocation5 + $0x538] sm:$0xff]
    %v266 = vld [vmem:[#allocation5 + $0x540] sm:$0xff]
    %v267 = vld [vmem:[#allocation5 + $0x548] sm:$0xff]
    %v268 = vld [vmem:[#allocation5 + $0x550] sm:$0xff]
    %v269 = vld [vmem:[#allocation5 + $0x558] sm:$0xff]
    %v270 = vld [vmem:[#allocation5 + $0x560] sm:$0xff]
    %v271 = vld [vmem:[#allocation5 + $0x568] sm:$0xff]
    %v272 = vld [vmem:[#allocation5 + $0x570] sm:$0xff]
    %v273 = vld [vmem:[#allocation5 + $0x578] sm:$0xff]
    %v274 = vld [vmem:[#allocation5 + $0x580] sm:$0xff]
    %v275 = vld [vmem:[#allocation5 + $0x588] sm:$0xff]
    %v276 = vld [vmem:[#allocation5 + $0x590] sm:$0xff]
    %v277 = vld [vmem:[#allocation5 + $0x598] sm:$0xff]
    %v278 = vld [vmem:[#allocation5 + $0x5a0] sm:$0xff]
    %v279 = vld [vmem:[#allocation5 + $0x5a8] sm:$0xff]
    %v280 = vld [vmem:[#allocation5 + $0x5b0] sm:$0xff]
    %v281 = vld [vmem:[#allocation5 + $0x5b8] sm:$0xff]
    %v282 = vld [vmem:[#allocation5 + $0x5c0] sm:$0xff]
    %v283 = vld [vmem:[#allocation5 + $0x5c8] sm:$0xff]
    %v284 = vld [vmem:[#allocation5 + $0x5d0] sm:$0xff]
    %v285 = vld [vmem:[#allocation5 + $0x5d8] sm:$0xff]
    %v286 = vld [vmem:[#allocation5 + $0x5e0] sm:$0xff]
    %v287 = vld [vmem:[#allocation5 + $0x5e8] sm:$0xff]
    %v288 = vld [vmem:[#allocation5 + $0x5f0] sm:$0xff]
    %v289 = vld [vmem:[#allocation5 + $0x5f8] sm:$0xff]
    %v290 = vld [vmem:[#allocation5 + $0x600] sm:$0xff]
    %v291 = vld [vmem:[#allocation5 + $0x608] sm:$0xff]
    %v292 = vld [vmem:[#allocation5 + $0x610] sm:$0xff]
    %v293 = vld [vmem:[#allocation5 + $0x618] sm:$0xff]
    %v294 = vld [vmem:[#allocation5 + $0x620] sm:$0xff]
    %v295 = vld [vmem:[#allocation5 + $0x628] sm:$0xff]
    %v296 = vld [vmem:[#allocation5 + $0x630] sm:$0xff]
    %v297 = vld [vmem:[#allocation5 + $0x638] sm:$0xff]
    %v298 = vld [vmem:[#allocation5 + $0x640] sm:$0xff]
    %v299 = vld [vmem:[#allocation5 + $0x648] sm:$0xff]
    %v300 = vld [vmem:[#allocation5 + $0x650] sm:$0xff]
    %v301 = vld [vmem:[#allocation5 + $0x658] sm:$0xff]
    %v302 = vld [vmem:[#allocation5 + $0x660] sm:$0xff]
    %v303 = vld [vmem:[#allocation5 + $0x668] sm:$0xff]
    %v304 = vld [vmem:[#allocation5 + $0x670] sm:$0xff]
    %v305 = vld [vmem:[#allocation5 + $0x678] sm:$0xff]
    %v306 = vld [vmem:[#allocation5 + $0x680] sm:$0xff]
    %v307 = vld [vmem:[#allocation5 + $0x688] sm:$0xff]
    %v308 = vld [vmem:[#allocation5 + $0x690] sm:$0xff]
    %v309 = vld [vmem:[#allocation5 + $0x698] sm:$0xff]
    %v310 = vld [vmem:[#allocation5 + $0x6a0] sm:$0xff]
    %v311 = vld [vmem:[#allocation5 + $0x6a8] sm:$0xff]
    %v312 = vld [vmem:[#allocation5 + $0x6b0] sm:$0xff]
    %v313 = vld [vmem:[#allocation5 + $0x6b8] sm:$0xff]
    %v314 = vld [vmem:[#allocation5 + $0x6c0] sm:$0xff]
    %v315 = vld [vmem:[#allocation5 + $0x6c8] sm:$0xff]
    %v316 = vld [vmem:[#allocation5 + $0x6d0] sm:$0xff]
    %v317 = vld [vmem:[#allocation5 + $0x6d8] sm:$0xff]
    %v318 = vld [vmem:[#allocation5 + $0x6e0] sm:$0xff]
    %v319 = vld [vmem:[#allocation5 + $0x6e8] sm:$0xff]
    %v320 = vld [vmem:[#allocation5 + $0x6f0] sm:$0xff]
    %v321 = vld [vmem:[#allocation5 + $0x6f8] sm:$0xff]
    %v322 = vld [vmem:[#allocation5 + $0x700] sm:$0xff]
    %v323 = vld [vmem:[#allocation5 + $0x708] sm:$0xff]
    %v324 = vld [vmem:[#allocation5 + $0x710] sm:$0xff]
    %v325 = vld [vmem:[#allocation5 + $0x718] sm:$0xff]
    %v326 = vld [vmem:[#allocation5 + $0x720] sm:$0xff]
    %v327 = vld [vmem:[#allocation5 + $0x728] sm:$0xff]
    %v328 = vld [vmem:[#allocation5 + $0x730] sm:$0xff]
    %v329 = vld [vmem:[#allocation5 + $0x738] sm:$0xff]
    %v330 = vld [vmem:[#allocation5 + $0x740] sm:$0xff]
    %v331 = vld [vmem:[#allocation5 + $0x748] sm:$0xff]
    %v332 = vld [vmem:[#allocation5 + $0x750] sm:$0xff]
    %v333 = vld [vmem:[#allocation5 + $0x758] sm:$0xff]
    %v334 = vld [vmem:[#allocation5 + $0x760] sm:$0xff]
    %v335 = vld [vmem:[#allocation5 + $0x768] sm:$0xff]
    %v336 = vld [vmem:[#allocation5 + $0x770] sm:$0xff]
    %v337 = vld [vmem:[#allocation5 + $0x778] sm:$0xff]
    %v338 = vld [vmem:[#allocation5 + $0x780] sm:$0xff]
    %v339 = vld [vmem:[#allocation5 + $0x788] sm:$0xff]
    %v340 = vld [vmem:[#allocation5 + $0x790] sm:$0xff]
    %v341 = vld [vmem:[#allocation5 + $0x798] sm:$0xff]
    %v342 = vld [vmem:[#allocation5 + $0x7a0] sm:$0xff]
    %v343 = vld [vmem:[#allocation5 + $0x7a8] sm:$0xff]
    %v344 = vld [vmem:[#allocation5 + $0x7b0] sm:$0xff]
    %v345 = vld [vmem:[#allocation5 + $0x7b8] sm:$0xff]
    %v346 = vld [vmem:[#allocation5 + $0x7c0] sm:$0xff]
    %v347 = vld [vmem:[#allocation5 + $0x7c8] sm:$0xff]
    %v348 = vld [vmem:[#allocation5 + $0x7d0] sm:$0xff]
    %v349 = vld [vmem:[#allocation5 + $0x7d8] sm:$0xff]
    %v350 = vld [vmem:[#allocation5 + $0x7e0] sm:$0xff]
    %v351 = vld [vmem:[#allocation5 + $0x7e8] sm:$0xff]
    %v352 = vld [vmem:[#allocation5 + $0x7f0] sm:$0xff]
    %v353 = vld [vmem:[#allocation5 + $0x7f8] sm:$0xff]
    %v354 = vld [vmem:[#allocation5 + $0x800] sm:$0xff]
    %v355 = vld [vmem:[#allocation5 + $0x808] sm:$0xff]
    %v356 = vld [vmem:[#allocation5 + $0x810] sm:$0xff]
    %v357 = vld [vmem:[#allocation5 + $0x818] sm:$0xff]
    %v358 = vld [vmem:[#allocation5 + $0x820] sm:$0xff]
    %v359 = vld [vmem:[#allocation5 + $0x828] sm:$0xff]
    %v360 = vld [vmem:[#allocation5 + $0x830] sm:$0xff]
    %v361 = vld [vmem:[#allocation5 + $0x838] sm:$0xff]
    %v362 = vld [vmem:[#allocation5 + $0x840] sm:$0xff]
    %v363 = vld [vmem:[#allocation5 + $0x848] sm:$0xff]
    %v364 = vld [vmem:[#allocation5 + $0x850] sm:$0xff]
    %v365 = vld [vmem:[#allocation5 + $0x858] sm:$0xff]
    %v366 = vld [vmem:[#allocation5 + $0x860] sm:$0xff]
    %v367 = vld [vmem:[#allocation5 + $0x868] sm:$0xff]
    %v368 = vld [vmem:[#allocation5 + $0x870] sm:$0xff]
    %v369 = vld [vmem:[#allocation5 + $0x878] sm:$0xff]
    %v370 = vld [vmem:[#allocation5 + $0x880] sm:$0xff]
    %v371 = vld [vmem:[#allocation5 + $0x888] sm:$0xff]
    %v372 = vld [vmem:[#allocation5 + $0x890] sm:$0xff]
    %v373 = vld [vmem:[#allocation5 + $0x898] sm:$0xff]
    %v374 = vld [vmem:[#allocation5 + $0x8a0] sm:$0xff]
    %v375 = vld [vmem:[#allocation5 + $0x8a8] sm:$0xff]
    %v376 = vld [vmem:[#allocation5 + $0x8b0] sm:$0xff]
    %v377 = vld [vmem:[#allocation5 + $0x8b8] sm:$0xff]
    %v378 = vld [vmem:[#allocation5 + $0x8c0] sm:$0xff]
    %v379 = vld [vmem:[#allocation5 + $0x8c8] sm:$0xff]
    %v380 = vld [vmem:[#allocation5 + $0x8d0] sm:$0xff]
    %v381 = vld [vmem:[#allocation5 + $0x8d8] sm:$0xff]
    %v382 = vld [vmem:[#allocation5 + $0x8e0] sm:$0xff]
    %v383 = vld [vmem:[#allocation5 + $0x8e8] sm:$0xff]
    %v384 = vld [vmem:[#allocation5 + $0x8f0] sm:$0xff]
    %v385 = vld [vmem:[#allocation5 + $0x8f8] sm:$0xff]
    %v386 = vld [vmem:[#allocation5 + $0x900] sm:$0xff]
    %v387 = vld [vmem:[#allocation5 + $0x908] sm:$0xff]
    %v388 = vld [vmem:[#allocation5 + $0x910] sm:$0xff]
    %v389 = vld [vmem:[#allocation5 + $0x918] sm:$0xff]
    %v390 = vld [vmem:[#allocation5 + $0x920] sm:$0xff]
    %v391 = vld [vmem:[#allocation5 + $0x928] sm:$0xff]
    %v392 = vld [vmem:[#allocation5 + $0x930] sm:$0xff]
    %v393 = vld [vmem:[#allocation5 + $0x938] sm:$0xff]
    %v394 = vld [vmem:[#allocation5 + $0x940] sm:$0xff]
    %v395 = vld [vmem:[#allocation5 + $0x948] sm:$0xff]
    %v396 = vld [vmem:[#allocation5 + $0x950] sm:$0xff]
    %v397 = vld [vmem:[#allocation5 + $0x958] sm:$0xff]
    %v398 = vld [vmem:[#allocation5 + $0x960] sm:$0xff]
    %v399 = vld [vmem:[#allocation5 + $0x968] sm:$0xff]
    %v400 = vld [vmem:[#allocation5 + $0x970] sm:$0xff]
    %v401 = vld [vmem:[#allocation5 + $0x978] sm:$0xff]
    %v402 = vld [vmem:[#allocation5 + $0x980] sm:$0xff]
    %v403 = vld [vmem:[#allocation5 + $0x988] sm:$0xff]
    %v404 = vld [vmem:[#allocation5 + $0x990] sm:$0xff]
    %v405 = vld [vmem:[#allocation5 + $0x998] sm:$0xff]
    %v406 = vld [vmem:[#allocation5 + $0x9a0] sm:$0xff]
    %v407 = vld [vmem:[#allocation5 + $0x9a8] sm:$0xff]
    %v408 = vld [vmem:[#allocation5 + $0x9b0] sm:$0xff]
    %v409 = vld [vmem:[#allocation5 + $0x9b8] sm:$0xff]
    %v410 = vld [vmem:[#allocation5 + $0x9c0] sm:$0xff]
    %v411 = vld [vmem:[#allocation5 + $0x9c8] sm:$0xff]
    %v412 = vld [vmem:[#allocation5 + $0x9d0] sm:$0xff]
    %v413 = vld [vmem:[#allocation5 + $0x9d8] sm:$0xff]
    %v414 = vld [vmem:[#allocation5 + $0x9e0] sm:$0xff]
    %v415 = vld [vmem:[#allocation5 + $0x9e8] sm:$0xff]
    %v416 = vld [vmem:[#allocation5 + $0x9f0] sm:$0xff]
    %v417 = vld [vmem:[#allocation5 + $0x9f8] sm:$0xff]
    %v418 = vld [vmem:[#allocation5 + $0xa00] sm:$0xff]
    %v419 = vld [vmem:[#allocation5 + $0xa08] sm:$0xff]
    %v420 = vld [vmem:[#allocation5 + $0xa10] sm:$0xff]
    %v421 = vld [vmem:[#allocation5 + $0xa18] sm:$0xff]
    %v422 = vld [vmem:[#allocation5 + $0xa20] sm:$0xff]
    %v423 = vld [vmem:[#allocation5 + $0xa28] sm:$0xff]
    %v424 = vld [vmem:[#allocation5 + $0xa30] sm:$0xff]
    %v425 = vld [vmem:[#allocation5 + $0xa38] sm:$0xff]
    %v426 = vld [vmem:[#allocation5 + $0xa40] sm:$0xff]
    %v427 = vld [vmem:[#allocation5 + $0xa48] sm:$0xff]
    %v428 = vld [vmem:[#allocation5 + $0xa50] sm:$0xff]
    %v429 = vld [vmem:[#allocation5 + $0xa58] sm:$0xff]
    %v430 = vld [vmem:[#allocation5 + $0xa60] sm:$0xff]
    %v431 = vld [vmem:[#allocation5 + $0xa68] sm:$0xff]
    %v432 = vld [vmem:[#allocation5 + $0xa70] sm:$0xff]
    %v433 = vld [vmem:[#allocation5 + $0xa78] sm:$0xff]
    %v434 = vld [vmem:[#allocation5 + $0xa80] sm:$0xff]
    %v435 = vld [vmem:[#allocation5 + $0xa88] sm:$0xff]
    %v436 = vld [vmem:[#allocation5 + $0xa90] sm:$0xff]
    %v437 = vld [vmem:[#allocation5 + $0xa98] sm:$0xff]
    %v438 = vld [vmem:[#allocation5 + $0xaa0] sm:$0xff]
    %v439 = vld [vmem:[#allocation5 + $0xaa8] sm:$0xff]
    %v440 = vld [vmem:[#allocation5 + $0xab0] sm:$0xff]
    %v441 = vld [vmem:[#allocation5 + $0xab8] sm:$0xff]
    %v442 = vld [vmem:[#allocation5 + $0xac0] sm:$0xff]
    %v443 = vld [vmem:[#allocation5 + $0xac8] sm:$0xff]
    %v444 = vld [vmem:[#allocation5 + $0xad0] sm:$0xff]
    %v445 = vld [vmem:[#allocation5 + $0xad8] sm:$0xff]
    %v446 = vld [vmem:[#allocation5 + $0xae0] sm:$0xff]
    %v447 = vld [vmem:[#allocation5 + $0xae8] sm:$0xff]
    %v448 = vld [vmem:[#allocation5 + $0xaf0] sm:$0xff]
    %v449 = vld [vmem:[#allocation5 + $0xaf8] sm:$0xff]
    %v450 = vld [vmem:[#allocation5 + $0xb00] sm:$0xff]
    %v451 = vld [vmem:[#allocation5 + $0xb08] sm:$0xff]
    %v452 = vld [vmem:[#allocation5 + $0xb10] sm:$0xff]
    %v453 = vld [vmem:[#allocation5 + $0xb18] sm:$0xff]
    %v454 = vld [vmem:[#allocation5 + $0xb20] sm:$0xff]
    %v455 = vld [vmem:[#allocation5 + $0xb28] sm:$0xff]
    %v456 = vld [vmem:[#allocation5 + $0xb30] sm:$0xff]
    %v457 = vld [vmem:[#allocation5 + $0xb38] sm:$0xff]
    %v458 = vld [vmem:[#allocation5 + $0xb40] sm:$0xff]
    %v459 = vld [vmem:[#allocation5 + $0xb48] sm:$0xff]
    %v460 = vld [vmem:[#allocation5 + $0xb50] sm:$0xff]
    %v461 = vld [vmem:[#allocation5 + $0xb58] sm:$0xff]
    %v462 = vld [vmem:[#allocation5 + $0xb60] sm:$0xff]
    %v463 = vld [vmem:[#allocation5 + $0xb68] sm:$0xff]
    %v464 = vld [vmem:[#allocation5 + $0xb70] sm:$0xff]
    %v465 = vld [vmem:[#allocation5 + $0xb78] sm:$0xff]
    %v466 = vld [vmem:[#allocation5 + $0xb80] sm:$0xff]
    %v467 = vld [vmem:[#allocation5 + $0xb88] sm:$0xff]
    %v468 = vld [vmem:[#allocation5 + $0xb90] sm:$0xff]
    %v469 = vld [vmem:[#allocation5 + $0xb98] sm:$0xff]
    %v470 = vld [vmem:[#allocation5 + $0xba0] sm:$0xff]
    %v471 = vld [vmem:[#allocation5 + $0xba8] sm:$0xff]
    %v472 = vld [vmem:[#allocation5 + $0xbb0] sm:$0xff]
    %v473 = vld [vmem:[#allocation5 + $0xbb8] sm:$0xff]
    %v474 = vld [vmem:[#allocation5 + $0xbc0] sm:$0xff]
    %v475 = vld [vmem:[#allocation5 + $0xbc8] sm:$0xff]
    %v476 = vld [vmem:[#allocation5 + $0xbd0] sm:$0xff]
    %v477 = vld [vmem:[#allocation5 + $0xbd8] sm:$0xff]
    %v478 = vld [vmem:[#allocation5 + $0xbe0] sm:$0xff]
    %v479 = vld [vmem:[#allocation5 + $0xbe8] sm:$0xff]
    %v480 = vld [vmem:[#allocation5 + $0xbf0] sm:$0xff]
    %v481 = vld [vmem:[#allocation5 + $0xbf8] sm:$0xff]
    %v482 = vld [vmem:[#allocation5 + $0xc00] sm:$0xff]
    %v483 = vld [vmem:[#allocation5 + $0xc08] sm:$0xff]
    %v484 = vld [vmem:[#allocation5 + $0xc10] sm:$0xff]
    %v485 = vld [vmem:[#allocation5 + $0xc18] sm:$0xff]
    %v486 = vld [vmem:[#allocation5 + $0xc20] sm:$0xff]
    %v487 = vld [vmem:[#allocation5 + $0xc28] sm:$0xff]
    %v488 = vld [vmem:[#allocation5 + $0xc30] sm:$0xff]
    %v489 = vld [vmem:[#allocation5 + $0xc38] sm:$0xff]
    %v490 = vld [vmem:[#allocation5 + $0xc40] sm:$0xff]
    %v491 = vld [vmem:[#allocation5 + $0xc48] sm:$0xff]
    %v492 = vld [vmem:[#allocation5 + $0xc50] sm:$0xff]
    %v493 = vld [vmem:[#allocation5 + $0xc58] sm:$0xff]
    %v494 = vld [vmem:[#allocation5 + $0xc60] sm:$0xff]
    %v495 = vld [vmem:[#allocation5 + $0xc68] sm:$0xff]
    %v496 = vld [vmem:[#allocation5 + $0xc70] sm:$0xff]
    %v497 = vld [vmem:[#allocation5 + $0xc78] sm:$0xff]
    %v498 = vld [vmem:[#allocation5 + $0xc80] sm:$0xff]
    %v499 = vld [vmem:[#allocation5 + $0xc88] sm:$0xff]
    %v500 = vld [vmem:[#allocation5 + $0xc90] sm:$0xff]
    %v501 = vld [vmem:[#allocation5 + $0xc98] sm:$0xff]
    %v502 = vld [vmem:[#allocation5 + $0xca0] sm:$0xff]
    %v503 = vld [vmem:[#allocation5 + $0xca8] sm:$0xff]
    %v504 = vld [vmem:[#allocation5 + $0xcb0] sm:$0xff]
    %v505 = vld [vmem:[#allocation5 + $0xcb8] sm:$0xff]
    %v506 = vld [vmem:[#allocation5 + $0xcc0] sm:$0xff]
    %v507 = vld [vmem:[#allocation5 + $0xcc8] sm:$0xff]
    %v508 = vld [vmem:[#allocation5 + $0xcd0] sm:$0xff]
    %v509 = vld [vmem:[#allocation5 + $0xcd8] sm:$0xff]
    %v510 = vld [vmem:[#allocation5 + $0xce0] sm:$0xff]
    %v511 = vld [vmem:[#allocation5 + $0xce8] sm:$0xff]
    %v512 = vld [vmem:[#allocation5 + $0xcf0] sm:$0xff]
    %v513 = vld [vmem:[#allocation5 + $0xcf8] sm:$0xff]
    %v514 = vld [vmem:[#allocation5 + $0xd00] sm:$0xff]
    %v515 = vld [vmem:[#allocation5 + $0xd08] sm:$0xff]
    %v516 = vld [vmem:[#allocation5 + $0xd10] sm:$0xff]
    %v517 = vld [vmem:[#allocation5 + $0xd18] sm:$0xff]
    %v518 = vld [vmem:[#allocation5 + $0xd20] sm:$0xff]
    %v519 = vld [vmem:[#allocation5 + $0xd28] sm:$0xff]
    %v520 = vld [vmem:[#allocation5 + $0xd30] sm:$0xff]
    %v521 = vld [vmem:[#allocation5 + $0xd38] sm:$0xff]
    %v522 = vld [vmem:[#allocation5 + $0xd40] sm:$0xff]
    %v523 = vld [vmem:[#allocation5 + $0xd48] sm:$0xff]
    %v524 = vld [vmem:[#allocation5 + $0xd50] sm:$0xff]
    %v525 = vld [vmem:[#allocation5 + $0xd58] sm:$0xff]
    %v526 = vld [vmem:[#allocation5 + $0xd60] sm:$0xff]
    %v527 = vld [vmem:[#allocation5 + $0xd68] sm:$0xff]
    %v528 = vld [vmem:[#allocation5 + $0xd70] sm:$0xff]
    %v529 = vld [vmem:[#allocation5 + $0xd78] sm:$0xff]
    %v530 = vld [vmem:[#allocation5 + $0xd80] sm:$0xff]
    %v531 = vld [vmem:[#allocation5 + $0xd88] sm:$0xff]
    %v532 = vld [vmem:[#allocation5 + $0xd90] sm:$0xff]
    %v533 = vld [vmem:[#allocation5 + $0xd98] sm:$0xff]
    %v534 = vld [vmem:[#allocation5 + $0xda0] sm:$0xff]
    %v535 = vld [vmem:[#allocation5 + $0xda8] sm:$0xff]
    %v536 = vld [vmem:[#allocation5 + $0xdb0] sm:$0xff]
    %v537 = vld [vmem:[#allocation5 + $0xdb8] sm:$0xff]
    %v538 = vld [vmem:[#allocation5 + $0xdc0] sm:$0xff]
    %v539 = vld [vmem:[#allocation5 + $0xdc8] sm:$0xff]
    %v540 = vld [vmem:[#allocation5 + $0xdd0] sm:$0xff]
    %v541 = vld [vmem:[#allocation5 + $0xdd8] sm:$0xff]
    %v542 = vld [vmem:[#allocation5 + $0xde0] sm:$0xff]
    %v543 = vld [vmem:[#allocation5 + $0xde8] sm:$0xff]
    %v544 = vld [vmem:[#allocation5 + $0xdf0] sm:$0xff]
    %v545 = vld [vmem:[#allocation5 + $0xdf8] sm:$0xff]
    %v546 = vld [vmem:[#allocation5 + $0xe00] sm:$0xff]
    %v547 = vld [vmem:[#allocation5 + $0xe08] sm:$0xff]
    %v548 = vld [vmem:[#allocation5 + $0xe10] sm:$0xff]
    %v549 = vld [vmem:[#allocation5 + $0xe18] sm:$0xff]
    %v550 = vld [vmem:[#allocation5 + $0xe20] sm:$0xff]
    %v551 = vld [vmem:[#allocation5 + $0xe28] sm:$0xff]
    %v552 = vld [vmem:[#allocation5 + $0xe30] sm:$0xff]
    %v553 = vld [vmem:[#allocation5 + $0xe38] sm:$0xff]
    %v554 = vld [vmem:[#allocation5 + $0xe40] sm:$0xff]
    %v555 = vld [vmem:[#allocation5 + $0xe48] sm:$0xff]
    %v556 = vld [vmem:[#allocation5 + $0xe50] sm:$0xff]
    %v557 = vld [vmem:[#allocation5 + $0xe58] sm:$0xff]
    %v558 = vld [vmem:[#allocation5 + $0xe60] sm:$0xff]
    %v559 = vld [vmem:[#allocation5 + $0xe68] sm:$0xff]
    %v560 = vld [vmem:[#allocation5 + $0xe70] sm:$0xff]
    %v561 = vld [vmem:[#allocation5 + $0xe78] sm:$0xff]
    %v562 = vld [vmem:[#allocation5 + $0xe80] sm:$0xff]
    %v563 = vld [vmem:[#allocation5 + $0xe88] sm:$0xff]
    %v564 = vld [vmem:[#allocation5 + $0xe90] sm:$0xff]
    %v565 = vld [vmem:[#allocation5 + $0xe98] sm:$0xff]
    %v566 = vld [vmem:[#allocation5 + $0xea0] sm:$0xff]
    %v567 = vld [vmem:[#allocation5 + $0xea8] sm:$0xff]
    %v568 = vld [vmem:[#allocation5 + $0xeb0] sm:$0xff]
    %v569 = vld [vmem:[#allocation5 + $0xeb8] sm:$0xff]
    %v570 = vld [vmem:[#allocation5 + $0xec0] sm:$0xff]
    %v571 = vld [vmem:[#allocation5 + $0xec8] sm:$0xff]
    %v572 = vld [vmem:[#allocation5 + $0xed0] sm:$0xff]
    %v573 = vld [vmem:[#allocation5 + $0xed8] sm:$0xff]
    %v574 = vld [vmem:[#allocation5 + $0xee0] sm:$0xff]
    %v575 = vld [vmem:[#allocation5 + $0xee8] sm:$0xff]
    %v576 = vld [vmem:[#allocation5 + $0xef0] sm:$0xff]
    %v577 = vld [vmem:[#allocation5 + $0xef8] sm:$0xff]
    %v578 = vld [vmem:[#allocation5 + $0xf00] sm:$0xff]
    %v579 = vld [vmem:[#allocation5 + $0xf08] sm:$0xff]
    %v580 = vld [vmem:[#allocation5 + $0xf10] sm:$0xff]
    %v581 = vld [vmem:[#allocation5 + $0xf18] sm:$0xff]
    %v582 = vld [vmem:[#allocation5 + $0xf20] sm:$0xff]
    %v583 = vld [vmem:[#allocation5 + $0xf28] sm:$0xff]
    %v584 = vld [vmem:[#allocation5 + $0xf30] sm:$0xff]
    %v585 = vld [vmem:[#allocation5 + $0xf38] sm:$0xff]
    %v586 = vld [vmem:[#allocation5 + $0xf40] sm:$0xff]
    %v587 = vld [vmem:[#allocation5 + $0xf48] sm:$0xff]
    %v588 = vld [vmem:[#allocation5 + $0xf50] sm:$0xff]
    %v589 = vld [vmem:[#allocation5 + $0xf58] sm:$0xff]
    %v590 = vld [vmem:[#allocation5 + $0xf60] sm:$0xff]
    %v591 = vld [vmem:[#allocation5 + $0xf68] sm:$0xff]
    %v592 = vld [vmem:[#allocation5 + $0xf70] sm:$0xff]
    %v593 = vld [vmem:[#allocation5 + $0xf78] sm:$0xff]
    %v594 = vld [vmem:[#allocation5 + $0xf80] sm:$0xff]
    %v595 = vld [vmem:[#allocation5 + $0xf88] sm:$0xff]
    %v596 = vld [vmem:[#allocation5 + $0xf90] sm:$0xff]
    %v597 = vld [vmem:[#allocation5 + $0xf98] sm:$0xff]
    %v598 = vld [vmem:[#allocation5 + $0xfa0] sm:$0xff]
    %v599 = vld [vmem:[#allocation5 + $0xfa8] sm:$0xff]
    %v600 = vld [vmem:[#allocation5 + $0xfb0] sm:$0xff]
    %v601 = vld [vmem:[#allocation5 + $0xfb8] sm:$0xff]
    %v602 = vld [vmem:[#allocation5 + $0xfc0] sm:$0xff]
    %v603 = vld [vmem:[#allocation5 + $0xfc8] sm:$0xff]
    %v604 = vld [vmem:[#allocation5 + $0xfd0] sm:$0xff]
    %v605 = vld [vmem:[#allocation5 + $0xfd8] sm:$0xff]
    %v606 = vld [vmem:[#allocation5 + $0xfe0] sm:$0xff]
    %v607 = vld [vmem:[#allocation5 + $0xfe8] sm:$0xff]
    %v608 = vld [vmem:[#allocation5 + $0xff0] sm:$0xff]
    %v609 = vld [vmem:[#allocation5 + $0xff8] sm:$0xff]
    %v610 = vld [vmem:[#allocation5 + $0x1000] sm:$0xff]
    %v611 = vld [vmem:[#allocation5 + $0x1008] sm:$0xff]
    %v612 = vld [vmem:[#allocation5 + $0x1010] sm:$0xff]
    %v613 = vld [vmem:[#allocation5 + $0x1018] sm:$0xff]
    %v614 = vld [vmem:[#allocation5 + $0x1020] sm:$0xff]
    %v615 = vld [vmem:[#allocation5 + $0x1028] sm:$0xff]
    %v616 = vld [vmem:[#allocation5 + $0x1030] sm:$0xff]
    %v617 = vld [vmem:[#allocation5 + $0x1038] sm:$0xff]
    %v618 = vld [vmem:[#allocation7] sm:$0x3]
    %v620 = vlaneseq
    %v621 = vshrl.u32 %v620, 7
    %v622 = vsub.s32 0, %v621
    %v623 = vrot.slane %v618, %v622
    %v624 = vlaneseq
    %v625 = vshrl.u32 %v624, 7
    %v626 = vsub.s32 1, %v625
    %v627 = vrot.slane %v618, %v626
    %vm630 = vcmask 261120
    %v632 = vsel %vm630, %v97, 0
    %634 = vmatprep.subr.mxu0 %v99
    %635 = vmatpush1.msra.mxu0 %v98
    %636 = vmatprep.subr.mxu0 %v101
    %637 = vmatpush1.msra.mxu0 %v100
    %638 = vmatprep.subr.mxu0 %v103
    %639 = vmatpush1.msra.mxu0 %v102
    %640 = vmatprep.subr.mxu0 %v105
    %641 = vmatpush1.msra.mxu0 %v104
    %642 = vmatprep.subr.mxu0 %v107
    %643 = vmatpush1.msra.mxu0 %v106
    %644 = vmatprep.subr.mxu0 %v109
    %645 = vmatpush1.msra.mxu0 %v108
    %646 = vmatprep.subr.mxu0 %v111
    %647 = vmatpush1.msra.mxu0 %v110
    %648 = vmatprep.subr.mxu0 %v113
    %649 = vmatpush1.msra.mxu0 %v112
    %650 = vmatprep.subr.mxu0 %v115
    %651 = vmatpush1.msra.mxu0 %v114
    %652 = vmatprep.subr.mxu0 %v117
    %653 = vmatpush1.msra.mxu0 %v116
    %654 = vmatprep.subr.mxu0 %v119
    %655 = vmatpush1.msra.mxu0 %v118
    %656 = vmatprep.subr.mxu0 %v121
    %657 = vmatpush1.msra.mxu0 %v120
    %658 = vmatprep.subr.mxu0 %v123
    %659 = vmatpush1.msra.mxu0 %v122
    %660 = vmatprep.subr.mxu0 %v125
    %661 = vmatpush1.msra.mxu0 %v124
    %662 = vmatprep.subr.mxu0 %v127
    %663 = vmatpush1.msra.mxu0 %v126
    %664 = vmatprep.subr.mxu0 %v129
    %665 = vmatpush1.msra.mxu0 %v128
    %666 = vmatprep.subr.mxu0 %v131
    %667 = vmatpush1.msra.mxu0 %v130
    %668 = vmatprep.subr.mxu0 %v133
    %669 = vmatpush1.msra.mxu0 %v132
    %670 = vmatprep.subr.mxu0 %v135
    %671 = vmatpush1.msra.mxu0 %v134
    %672 = vmatprep.subr.mxu0 %v137
    %673 = vmatpush1.msra.mxu0 %v136
    %674 = vmatprep.subr.mxu0 %v139
    %675 = vmatpush1.msra.mxu0 %v138
    %676 = vmatprep.subr.mxu0 %v141
    %677 = vmatpush1.msra.mxu0 %v140
    %678 = vmatprep.subr.mxu0 %v143
    %679 = vmatpush1.msra.mxu0 %v142
    %680 = vmatprep.subr.mxu0 %v145
    %681 = vmatpush1.msra.mxu0 %v144
    %682 = vmatprep.subr.mxu0 %v147
    %683 = vmatpush1.msra.mxu0 %v146
    %684 = vmatprep.subr.mxu0 %v149
    %685 = vmatpush1.msra.mxu0 %v148
    %686 = vmatprep.subr.mxu0 %v151
    %687 = vmatpush1.msra.mxu0 %v150
    %688 = vmatprep.subr.mxu0 %v153
    %689 = vmatpush1.msra.mxu0 %v152
    %690 = vmatprep.subr.mxu0 %v155
    %691 = vmatpush1.msra.mxu0 %v154
    %692 = vmatprep.subr.mxu0 %v157
    %693 = vmatpush1.msra.mxu0 %v156
    %694 = vmatprep.subr.mxu0 %v159
    %695 = vmatpush1.msra.mxu0 %v158
    %696 = vmatprep.subr.mxu0 %v161
    %697 = vmatpush1.msra.mxu0 %v160
    %698 = vmatprep.mubr.f32.mxu0 %v82
    %699 = vmatmul.mubr.f32.gmra.mrb[0].mxu0 %v81
    %v700 = vpop.f32.mrb[0].mxu0
    %v701 = vadd.f32 %v623, %v700
    %v702 = vpop.f32.mrb[0].mxu0
    %v703 = vadd.f32 %v627, %v702
    %704 = vdwg.mxu0
    %705 = vmatprep.subr.mxu0 %v163
    %706 = vmatpush1.msra.mxu0 %v162
    %707 = vmatprep.subr.mxu0 %v165
    %708 = vmatpush1.msra.mxu0 %v164
    %709 = vmatprep.subr.mxu0 %v167
    %710 = vmatpush1.msra.mxu0 %v166
    %711 = vmatprep.subr.mxu0 %v169
    %712 = vmatpush1.msra.mxu0 %v168
    %713 = vmatprep.subr.mxu0 %v171
    %714 = vmatpush1.msra.mxu0 %v170
    %715 = vmatprep.subr.mxu0 %v173
    %716 = vmatpush1.msra.mxu0 %v172
    %717 = vmatprep.subr.mxu0 %v175
    %718 = vmatpush1.msra.mxu0 %v174
    %719 = vmatprep.subr.mxu0 %v177
    %720 = vmatpush1.msra.mxu0 %v176
    %721 = vmatprep.subr.mxu0 %v179
    %722 = vmatpush1.msra.mxu0 %v178
    %723 = vmatprep.subr.mxu0 %v181
    %724 = vmatpush1.msra.mxu0 %v180
    %725 = vmatprep.subr.mxu0 %v183
    %726 = vmatpush1.msra.mxu0 %v182
    %727 = vmatprep.subr.mxu0 %v185
    %728 = vmatpush1.msra.mxu0 %v184
    %729 = vmatprep.subr.mxu0 %v187
    %730 = vmatpush1.msra.mxu0 %v186
    %731 = vmatprep.subr.mxu0 %v189
    %732 = vmatpush1.msra.mxu0 %v188
    %733 = vmatprep.subr.mxu0 %v191
    %734 = vmatpush1.msra.mxu0 %v190
    %735 = vmatprep.subr.mxu0 %v193
    %736 = vmatpush1.msra.mxu0 %v192
    %737 = vmatprep.subr.mxu0 %v195
    %738 = vmatpush1.msra.mxu0 %v194
    %739 = vmatprep.subr.mxu0 %v197
    %740 = vmatpush1.msra.mxu0 %v196
    %741 = vmatprep.subr.mxu0 %v199
    %742 = vmatpush1.msra.mxu0 %v198
    %743 = vmatprep.subr.mxu0 %v201
    %744 = vmatpush1.msra.mxu0 %v200
    %745 = vmatprep.subr.mxu0 %v203
    %746 = vmatpush1.msra.mxu0 %v202
    %747 = vmatprep.subr.mxu0 %v205
    %748 = vmatpush1.msra.mxu0 %v204
    %749 = vmatprep.subr.mxu0 %v207
    %750 = vmatpush1.msra.mxu0 %v206
    %751 = vmatprep.subr.mxu0 %v209
    %752 = vmatpush1.msra.mxu0 %v208
    %753 = vmatprep.subr.mxu0 %v211
    %754 = vmatpush1.msra.mxu0 %v210
    %755 = vmatprep.subr.mxu0 %v213
    %756 = vmatpush1.msra.mxu0 %v212
    %757 = vmatprep.subr.mxu0 %v215
    %758 = vmatpush1.msra.mxu0 %v214
    %759 = vmatprep.subr.mxu0 %v217
    %760 = vmatpush1.msra.mxu0 %v216
    %761 = vmatprep.subr.mxu0 %v219
    %762 = vmatpush1.msra.mxu0 %v218
    %763 = vmatprep.subr.mxu0 %v221
    %764 = vmatpush1.msra.mxu0 %v220
    %765 = vmatprep.subr.mxu0 %v223
    %766 = vmatpush1.msra.mxu0 %v222
    %767 = vmatprep.subr.mxu0 %v225
    %768 = vmatpush1.msra.mxu0 %v224
    %769 = vmatprep.mubr.f32.mxu0 %v84
    %770 = vmatmul.mubr.f32.gmra.mrb[0].mxu0 %v83
    %v771 = vpop.f32.mrb[0].mxu0
    %v772 = vadd.f32 %v701, %v771
    %v773 = vpop.f32.mrb[0].mxu0
    %v774 = vadd.f32 %v703, %v773
    %775 = vdwg.mxu0
    %776 = vmatprep.subr.mxu0 %v227
    %777 = vmatpush1.msra.mxu0 %v226
    %778 = vmatprep.subr.mxu0 %v229
    %779 = vmatpush1.msra.mxu0 %v228
    %780 = vmatprep.subr.mxu0 %v231
    %781 = vmatpush1.msra.mxu0 %v230
    %782 = vmatprep.subr.mxu0 %v233
    %783 = vmatpush1.msra.mxu0 %v232
    %784 = vmatprep.subr.mxu0 %v235
    %785 = vmatpush1.msra.mxu0 %v234
    %786 = vmatprep.subr.mxu0 %v237
    %787 = vmatpush1.msra.mxu0 %v236
    %788 = vmatprep.subr.mxu0 %v239
    %789 = vmatpush1.msra.mxu0 %v238
    %790 = vmatprep.subr.mxu0 %v241
    %791 = vmatpush1.msra.mxu0 %v240
    %792 = vmatprep.subr.mxu0 %v243
    %793 = vmatpush1.msra.mxu0 %v242
    %794 = vmatprep.subr.mxu0 %v245
    %795 = vmatpush1.msra.mxu0 %v244
    %796 = vmatprep.subr.mxu0 %v247
    %797 = vmatpush1.msra.mxu0 %v246
    %798 = vmatprep.subr.mxu0 %v249
    %799 = vmatpush1.msra.mxu0 %v248
    %800 = vmatprep.subr.mxu0 %v251
    %801 = vmatpush1.msra.mxu0 %v250
    %802 = vmatprep.subr.mxu0 %v253
    %803 = vmatpush1.msra.mxu0 %v252
    %804 = vmatprep.subr.mxu0 %v255
    %805 = vmatpush1.msra.mxu0 %v254
    %806 = vmatprep.subr.mxu0 %v257
    %807 = vmatpush1.msra.mxu0 %v256
    %808 = vmatprep.subr.mxu0 %v259
    %809 = vmatpush1.msra.mxu0 %v258
    %810 = vmatprep.subr.mxu0 %v261
    %811 = vmatpush1.msra.mxu0 %v260
    %812 = vmatprep.subr.mxu0 %v263
    %813 = vmatpush1.msra.mxu0 %v262
    %814 = vmatprep.subr.mxu0 %v265
    %815 = vmatpush1.msra.mxu0 %v264
    %816 = vmatprep.subr.mxu0 %v267
    %817 = vmatpush1.msra.mxu0 %v266
    %818 = vmatprep.subr.mxu0 %v269
    %819 = vmatpush1.msra.mxu0 %v268
    %820 = vmatprep.subr.mxu0 %v271
    %821 = vmatpush1.msra.mxu0 %v270
    %822 = vmatprep.subr.mxu0 %v273
    %823 = vmatpush1.msra.mxu0 %v272
    %824 = vmatprep.subr.mxu0 %v275
    %825 = vmatpush1.msra.mxu0 %v274
    %826 = vmatprep.subr.mxu0 %v277
    %827 = vmatpush1.msra.mxu0 %v276
    %828 = vmatprep.subr.mxu0 %v279
    %829 = vmatpush1.msra.mxu0 %v278
    %830 = vmatprep.subr.mxu0 %v281
    %831 = vmatpush1.msra.mxu0 %v280
    %832 = vmatprep.subr.mxu0 %v283
    %833 = vmatpush1.msra.mxu0 %v282
    %834 = vmatprep.subr.mxu0 %v285
    %835 = vmatpush1.msra.mxu0 %v284
    %836 = vmatprep.subr.mxu0 %v287
    %837 = vmatpush1.msra.mxu0 %v286
    %838 = vmatprep.subr.mxu0 %v289
    %839 = vmatpush1.msra.mxu0 %v288
    %840 = vmatprep.mubr.f32.mxu0 %v86
    %841 = vmatmul.mubr.f32.gmra.mrb[0].mxu0 %v85
    %v842 = vpop.f32.mrb[0].mxu0
    %v843 = vadd.f32 %v772, %v842
    %v844 = vpop.f32.mrb[0].mxu0
    %v845 = vadd.f32 %v774, %v844
    %846 = vdwg.mxu0
    %847 = vmatprep.subr.mxu0 %v291
    %848 = vmatpush1.msra.mxu0 %v290
    %849 = vmatprep.subr.mxu0 %v293
    %850 = vmatpush1.msra.mxu0 %v292
    %851 = vmatprep.subr.mxu0 %v295
    %852 = vmatpush1.msra.mxu0 %v294
    %853 = vmatprep.subr.mxu0 %v297
    %854 = vmatpush1.msra.mxu0 %v296
    %855 = vmatprep.subr.mxu0 %v299
    %856 = vmatpush1.msra.mxu0 %v298
    %857 = vmatprep.subr.mxu0 %v301
    %858 = vmatpush1.msra.mxu0 %v300
    %859 = vmatprep.subr.mxu0 %v303
    %860 = vmatpush1.msra.mxu0 %v302
    %861 = vmatprep.subr.mxu0 %v305
    %862 = vmatpush1.msra.mxu0 %v304
    %863 = vmatprep.subr.mxu0 %v307
    %864 = vmatpush1.msra.mxu0 %v306
    %865 = vmatprep.subr.mxu0 %v309
    %866 = vmatpush1.msra.mxu0 %v308
    %867 = vmatprep.subr.mxu0 %v311
    %868 = vmatpush1.msra.mxu0 %v310
    %869 = vmatprep.subr.mxu0 %v313
    %870 = vmatpush1.msra.mxu0 %v312
    %871 = vmatprep.subr.mxu0 %v315
    %872 = vmatpush1.msra.mxu0 %v314
    %873 = vmatprep.subr.mxu0 %v317
    %874 = vmatpush1.msra.mxu0 %v316
    %875 = vmatprep.subr.mxu0 %v319
    %876 = vmatpush1.msra.mxu0 %v318
    %877 = vmatprep.subr.mxu0 %v321
    %878 = vmatpush1.msra.mxu0 %v320
    %879 = vmatprep.subr.mxu0 %v323
    %880 = vmatpush1.msra.mxu0 %v322
    %881 = vmatprep.subr.mxu0 %v325
    %882 = vmatpush1.msra.mxu0 %v324
    %883 = vmatprep.subr.mxu0 %v327
    %884 = vmatpush1.msra.mxu0 %v326
    %885 = vmatprep.subr.mxu0 %v329
    %886 = vmatpush1.msra.mxu0 %v328
    %887 = vmatprep.subr.mxu0 %v331
    %888 = vmatpush1.msra.mxu0 %v330
    %889 = vmatprep.subr.mxu0 %v333
    %890 = vmatpush1.msra.mxu0 %v332
    %891 = vmatprep.subr.mxu0 %v335
    %892 = vmatpush1.msra.mxu0 %v334
    %893 = vmatprep.subr.mxu0 %v337
    %894 = vmatpush1.msra.mxu0 %v336
    %895 = vmatprep.subr.mxu0 %v339
    %896 = vmatpush1.msra.mxu0 %v338
    %897 = vmatprep.subr.mxu0 %v341
    %898 = vmatpush1.msra.mxu0 %v340
    %899 = vmatprep.subr.mxu0 %v343
    %900 = vmatpush1.msra.mxu0 %v342
    %901 = vmatprep.subr.mxu0 %v345
    %902 = vmatpush1.msra.mxu0 %v344
    %903 = vmatprep.subr.mxu0 %v347
    %904 = vmatpush1.msra.mxu0 %v346
    %905 = vmatprep.subr.mxu0 %v349
    %906 = vmatpush1.msra.mxu0 %v348
    %907 = vmatprep.subr.mxu0 %v351
    %908 = vmatpush1.msra.mxu0 %v350
    %909 = vmatprep.subr.mxu0 %v353
    %910 = vmatpush1.msra.mxu0 %v352
    %911 = vmatprep.mubr.f32.mxu0 %v88
    %912 = vmatmul.mubr.f32.gmra.mrb[0].mxu0 %v87
    %v913 = vpop.f32.mrb[0].mxu0
    %v914 = vadd.f32 %v843, %v913
    %v915 = vpop.f32.mrb[0].mxu0
    %v916 = vadd.f32 %v845, %v915
    %917 = vdwg.mxu0
    %918 = vmatprep.subr.mxu0 %v355
    %919 = vmatpush1.msra.mxu0 %v354
    %920 = vmatprep.subr.mxu0 %v357
    %921 = vmatpush1.msra.mxu0 %v356
    %922 = vmatprep.subr.mxu0 %v359
    %923 = vmatpush1.msra.mxu0 %v358
    %924 = vmatprep.subr.mxu0 %v361
    %925 = vmatpush1.msra.mxu0 %v360
    %926 = vmatprep.subr.mxu0 %v363
    %927 = vmatpush1.msra.mxu0 %v362
    %928 = vmatprep.subr.mxu0 %v365
    %929 = vmatpush1.msra.mxu0 %v364
    %930 = vmatprep.subr.mxu0 %v367
    %931 = vmatpush1.msra.mxu0 %v366
    %932 = vmatprep.subr.mxu0 %v369
    %933 = vmatpush1.msra.mxu0 %v368
    %934 = vmatprep.subr.mxu0 %v371
    %935 = vmatpush1.msra.mxu0 %v370
    %936 = vmatprep.subr.mxu0 %v373
    %937 = vmatpush1.msra.mxu0 %v372
    %938 = vmatprep.subr.mxu0 %v375
    %939 = vmatpush1.msra.mxu0 %v374
    %940 = vmatprep.subr.mxu0 %v377
    %941 = vmatpush1.msra.mxu0 %v376
    %942 = vmatprep.subr.mxu0 %v379
    %943 = vmatpush1.msra.mxu0 %v378
    %944 = vmatprep.subr.mxu0 %v381
    %945 = vmatpush1.msra.mxu0 %v380
    %946 = vmatprep.subr.mxu0 %v383
    %947 = vmatpush1.msra.mxu0 %v382
    %948 = vmatprep.subr.mxu0 %v385
    %949 = vmatpush1.msra.mxu0 %v384
    %950 = vmatprep.subr.mxu0 %v387
    %951 = vmatpush1.msra.mxu0 %v386
    %952 = vmatprep.subr.mxu0 %v389
    %953 = vmatpush1.msra.mxu0 %v388
    %954 = vmatprep.subr.mxu0 %v391
    %955 = vmatpush1.msra.mxu0 %v390
    %956 = vmatprep.subr.mxu0 %v393
    %957 = vmatpush1.msra.mxu0 %v392
    %958 = vmatprep.subr.mxu0 %v395
    %959 = vmatpush1.msra.mxu0 %v394
    %960 = vmatprep.subr.mxu0 %v397
    %961 = vmatpush1.msra.mxu0 %v396
    %962 = vmatprep.subr.mxu0 %v399
    %963 = vmatpush1.msra.mxu0 %v398
    %964 = vmatprep.subr.mxu0 %v401
    %965 = vmatpush1.msra.mxu0 %v400
    %966 = vmatprep.subr.mxu0 %v403
    %967 = vmatpush1.msra.mxu0 %v402
    %968 = vmatprep.subr.mxu0 %v405
    %969 = vmatpush1.msra.mxu0 %v404
    %970 = vmatprep.subr.mxu0 %v407
    %971 = vmatpush1.msra.mxu0 %v406
    %972 = vmatprep.subr.mxu0 %v409
    %973 = vmatpush1.msra.mxu0 %v408
    %974 = vmatprep.subr.mxu0 %v411
    %975 = vmatpush1.msra.mxu0 %v410
    %976 = vmatprep.subr.mxu0 %v413
    %977 = vmatpush1.msra.mxu0 %v412
    %978 = vmatprep.subr.mxu0 %v415
    %979 = vmatpush1.msra.mxu0 %v414
    %980 = vmatprep.subr.mxu0 %v417
    %981 = vmatpush1.msra.mxu0 %v416
    %982 = vmatprep.mubr.f32.mxu0 %v90
    %983 = vmatmul.mubr.f32.gmra.mrb[0].mxu0 %v89
    %v984 = vpop.f32.mrb[0].mxu0
    %v985 = vadd.f32 %v914, %v984
    %v986 = vpop.f32.mrb[0].mxu0
    %v987 = vadd.f32 %v916, %v986
    %988 = vdwg.mxu0
    %989 = vmatprep.subr.mxu0 %v419
    %990 = vmatpush1.msra.mxu0 %v418
    %991 = vmatprep.subr.mxu0 %v421
    %992 = vmatpush1.msra.mxu0 %v420
    %993 = vmatprep.subr.mxu0 %v423
    %994 = vmatpush1.msra.mxu0 %v422
    %995 = vmatprep.subr.mxu0 %v425
    %996 = vmatpush1.msra.mxu0 %v424
    %997 = vmatprep.subr.mxu0 %v427
    %998 = vmatpush1.msra.mxu0 %v426
    %999 = vmatprep.subr.mxu0 %v429
    %1000 = vmatpush1.msra.mxu0 %v428
    %1001 = vmatprep.subr.mxu0 %v431
    %1002 = vmatpush1.msra.mxu0 %v430
    %1003 = vmatprep.subr.mxu0 %v433
    %1004 = vmatpush1.msra.mxu0 %v432
    %1005 = vmatprep.subr.mxu0 %v435
    %1006 = vmatpush1.msra.mxu0 %v434
    %1007 = vmatprep.subr.mxu0 %v437
    %1008 = vmatpush1.msra.mxu0 %v436
    %1009 = vmatprep.subr.mxu0 %v439
    %1010 = vmatpush1.msra.mxu0 %v438
    %1011 = vmatprep.subr.mxu0 %v441
    %1012 = vmatpush1.msra.mxu0 %v440
    %1013 = vmatprep.subr.mxu0 %v443
    %1014 = vmatpush1.msra.mxu0 %v442
    %1015 = vmatprep.subr.mxu0 %v445
    %1016 = vmatpush1.msra.mxu0 %v444
    %1017 = vmatprep.subr.mxu0 %v447
    %1018 = vmatpush1.msra.mxu0 %v446
    %1019 = vmatprep.subr.mxu0 %v449
    %1020 = vmatpush1.msra.mxu0 %v448
    %1021 = vmatprep.subr.mxu0 %v451
    %1022 = vmatpush1.msra.mxu0 %v450
    %1023 = vmatprep.subr.mxu0 %v453
    %1024 = vmatpush1.msra.mxu0 %v452
    %1025 = vmatprep.subr.mxu0 %v455
    %1026 = vmatpush1.msra.mxu0 %v454
    %1027 = vmatprep.subr.mxu0 %v457
    %1028 = vmatpush1.msra.mxu0 %v456
    %1029 = vmatprep.subr.mxu0 %v459
    %1030 = vmatpush1.msra.mxu0 %v458
    %1031 = vmatprep.subr.mxu0 %v461
    %1032 = vmatpush1.msra.mxu0 %v460
    %1033 = vmatprep.subr.mxu0 %v463
    %1034 = vmatpush1.msra.mxu0 %v462
    %1035 = vmatprep.subr.mxu0 %v465
    %1036 = vmatpush1.msra.mxu0 %v464
    %1037 = vmatprep.subr.mxu0 %v467
    %1038 = vmatpush1.msra.mxu0 %v466
    %1039 = vmatprep.subr.mxu0 %v469
    %1040 = vmatpush1.msra.mxu0 %v468
    %1041 = vmatprep.subr.mxu0 %v471
    %1042 = vmatpush1.msra.mxu0 %v470
    %1043 = vmatprep.subr.mxu0 %v473
    %1044 = vmatpush1.msra.mxu0 %v472
    %1045 = vmatprep.subr.mxu0 %v475
    %1046 = vmatpush1.msra.mxu0 %v474
    %1047 = vmatprep.subr.mxu0 %v477
    %1048 = vmatpush1.msra.mxu0 %v476
    %1049 = vmatprep.subr.mxu0 %v479
    %1050 = vmatpush1.msra.mxu0 %v478
    %1051 = vmatprep.subr.mxu0 %v481
    %1052 = vmatpush1.msra.mxu0 %v480
    %1053 = vmatprep.mubr.f32.mxu0 %v92
    %1054 = vmatmul.mubr.f32.gmra.mrb[0].mxu0 %v91
    %v1055 = vpop.f32.mrb[0].mxu0
    %v1056 = vadd.f32 %v985, %v1055
    %v1057 = vpop.f32.mrb[0].mxu0
    %v1058 = vadd.f32 %v987, %v1057
    %1059 = vdwg.mxu0
    %1060 = vmatprep.subr.mxu0 %v483
    %1061 = vmatpush1.msra.mxu0 %v482
    %1062 = vmatprep.subr.mxu0 %v485
    %1063 = vmatpush1.msra.mxu0 %v484
    %1064 = vmatprep.subr.mxu0 %v487
    %1065 = vmatpush1.msra.mxu0 %v486
    %1066 = vmatprep.subr.mxu0 %v489
    %1067 = vmatpush1.msra.mxu0 %v488
    %1068 = vmatprep.subr.mxu0 %v491
    %1069 = vmatpush1.msra.mxu0 %v490
    %1070 = vmatprep.subr.mxu0 %v493
    %1071 = vmatpush1.msra.mxu0 %v492
    %1072 = vmatprep.subr.mxu0 %v495
    %1073 = vmatpush1.msra.mxu0 %v494
    %1074 = vmatprep.subr.mxu0 %v497
    %1075 = vmatpush1.msra.mxu0 %v496
    %1076 = vmatprep.subr.mxu0 %v499
    %1077 = vmatpush1.msra.mxu0 %v498
    %1078 = vmatprep.subr.mxu0 %v501
    %1079 = vmatpush1.msra.mxu0 %v500
    %1080 = vmatprep.subr.mxu0 %v503
    %1081 = vmatpush1.msra.mxu0 %v502
    %1082 = vmatprep.subr.mxu0 %v505
    %1083 = vmatpush1.msra.mxu0 %v504
    %1084 = vmatprep.subr.mxu0 %v507
    %1085 = vmatpush1.msra.mxu0 %v506
    %1086 = vmatprep.subr.mxu0 %v509
    %1087 = vmatpush1.msra.mxu0 %v508
    %1088 = vmatprep.subr.mxu0 %v511
    %1089 = vmatpush1.msra.mxu0 %v510
    %1090 = vmatprep.subr.mxu0 %v513
    %1091 = vmatpush1.msra.mxu0 %v512
    %1092 = vmatprep.subr.mxu0 %v515
    %1093 = vmatpush1.msra.mxu0 %v514
    %1094 = vmatprep.subr.mxu0 %v517
    %1095 = vmatpush1.msra.mxu0 %v516
    %1096 = vmatprep.subr.mxu0 %v519
    %1097 = vmatpush1.msra.mxu0 %v518
    %1098 = vmatprep.subr.mxu0 %v521
    %1099 = vmatpush1.msra.mxu0 %v520
    %1100 = vmatprep.subr.mxu0 %v523
    %1101 = vmatpush1.msra.mxu0 %v522
    %1102 = vmatprep.subr.mxu0 %v525
    %1103 = vmatpush1.msra.mxu0 %v524
    %1104 = vmatprep.subr.mxu0 %v527
    %1105 = vmatpush1.msra.mxu0 %v526
    %1106 = vmatprep.subr.mxu0 %v529
    %1107 = vmatpush1.msra.mxu0 %v528
    %1108 = vmatprep.subr.mxu0 %v531
    %1109 = vmatpush1.msra.mxu0 %v530
    %1110 = vmatprep.subr.mxu0 %v533
    %1111 = vmatpush1.msra.mxu0 %v532
    %1112 = vmatprep.subr.mxu0 %v535
    %1113 = vmatpush1.msra.mxu0 %v534
    %1114 = vmatprep.subr.mxu0 %v537
    %1115 = vmatpush1.msra.mxu0 %v536
    %1116 = vmatprep.subr.mxu0 %v539
    %1117 = vmatpush1.msra.mxu0 %v538
    %1118 = vmatprep.subr.mxu0 %v541
    %1119 = vmatpush1.msra.mxu0 %v540
    %1120 = vmatprep.subr.mxu0 %v543
    %1121 = vmatpush1.msra.mxu0 %v542
    %1122 = vmatprep.subr.mxu0 %v545
    %1123 = vmatpush1.msra.mxu0 %v544
    %1124 = vmatprep.mubr.f32.mxu0 %v94
    %1125 = vmatmul.mubr.f32.gmra.mrb[0].mxu0 %v93
    %v1126 = vpop.f32.mrb[0].mxu0
    %v1127 = vadd.f32 %v1056, %v1126
    %v1128 = vpop.f32.mrb[0].mxu0
    %v1129 = vadd.f32 %v1058, %v1128
    %1130 = vdwg.mxu0
    %1131 = vmatprep.subr.mxu0 %v547
    %1132 = vmatpush1.msra.mxu0 %v546
    %1133 = vmatprep.subr.mxu0 %v549
    %1134 = vmatpush1.msra.mxu0 %v548
    %1135 = vmatprep.subr.mxu0 %v551
    %1136 = vmatpush1.msra.mxu0 %v550
    %1137 = vmatprep.subr.mxu0 %v553
    %1138 = vmatpush1.msra.mxu0 %v552
    %1139 = vmatprep.subr.mxu0 %v555
    %1140 = vmatpush1.msra.mxu0 %v554
    %1141 = vmatprep.subr.mxu0 %v557
    %1142 = vmatpush1.msra.mxu0 %v556
    %1143 = vmatprep.subr.mxu0 %v559
    %1144 = vmatpush1.msra.mxu0 %v558
    %1145 = vmatprep.subr.mxu0 %v561
    %1146 = vmatpush1.msra.mxu0 %v560
    %1147 = vmatprep.subr.mxu0 %v563
    %1148 = vmatpush1.msra.mxu0 %v562
    %1149 = vmatprep.subr.mxu0 %v565
    %1150 = vmatpush1.msra.mxu0 %v564
    %1151 = vmatprep.subr.mxu0 %v567
    %1152 = vmatpush1.msra.mxu0 %v566
    %1153 = vmatprep.subr.mxu0 %v569
    %1154 = vmatpush1.msra.mxu0 %v568
    %1155 = vmatprep.subr.mxu0 %v571
    %1156 = vmatpush1.msra.mxu0 %v570
    %1157 = vmatprep.subr.mxu0 %v573
    %1158 = vmatpush1.msra.mxu0 %v572
    %1159 = vmatprep.subr.mxu0 %v575
    %1160 = vmatpush1.msra.mxu0 %v574
    %1161 = vmatprep.subr.mxu0 %v577
    %1162 = vmatpush1.msra.mxu0 %v576
    %1163 = vmatprep.subr.mxu0 %v579
    %1164 = vmatpush1.msra.mxu0 %v578
    %1165 = vmatprep.subr.mxu0 %v581
    %1166 = vmatpush1.msra.mxu0 %v580
    %1167 = vmatprep.subr.mxu0 %v583
    %1168 = vmatpush1.msra.mxu0 %v582
    %1169 = vmatprep.subr.mxu0 %v585
    %1170 = vmatpush1.msra.mxu0 %v584
    %1171 = vmatprep.subr.mxu0 %v587
    %1172 = vmatpush1.msra.mxu0 %v586
    %1173 = vmatprep.subr.mxu0 %v589
    %1174 = vmatpush1.msra.mxu0 %v588
    %1175 = vmatprep.subr.mxu0 %v591
    %1176 = vmatpush1.msra.mxu0 %v590
    %1177 = vmatprep.subr.mxu0 %v593
    %1178 = vmatpush1.msra.mxu0 %v592
    %1179 = vmatprep.subr.mxu0 %v595
    %1180 = vmatpush1.msra.mxu0 %v594
    %1181 = vmatprep.subr.mxu0 %v597
    %1182 = vmatpush1.msra.mxu0 %v596
    %1183 = vmatprep.subr.mxu0 %v599
    %1184 = vmatpush1.msra.mxu0 %v598
    %1185 = vmatprep.subr.mxu0 %v601
    %1186 = vmatpush1.msra.mxu0 %v600
    %1187 = vmatprep.subr.mxu0 %v603
    %1188 = vmatpush1.msra.mxu0 %v602
    %1189 = vmatprep.subr.mxu0 %v605
    %1190 = vmatpush1.msra.mxu0 %v604
    %1191 = vmatprep.subr.mxu0 %v607
    %1192 = vmatpush1.msra.mxu0 %v606
    %1193 = vmatprep.subr.mxu0 %v609
    %1194 = vmatpush1.msra.mxu0 %v608
    %1195 = vmatprep.mubr.f32.mxu0 %v96
    %1196 = vmatmul.mubr.f32.gmra.mrb[0].mxu0 %v95
    %v1197 = vpop.f32.mrb[0].mxu0
    %v1198 = vadd.f32 %v1127, %v1197
    %v1199 = vpop.f32.mrb[0].mxu0
    %v1200 = vadd.f32 %v1129, %v1199
    %1201 = vdwg.mxu0
    %1202 = vmatprep.subr.mxu0 %v611
    %1203 = vmatpush1.msra.mxu0 %v610
    %1204 = vmatprep.subr.mxu0 %v613
    %1205 = vmatpush1.msra.mxu0 %v612
    %1206 = vmatprep.subr.mxu0 %v615
    %1207 = vmatpush1.msra.mxu0 %v614
    %1208 = vmatprep.subr.mxu0 %v617
    %1209 = vmatpush1.msra.mxu0 %v616
    %1210 = vmatprep.subr.mxu0 0.0
    %1211 = vmatpush1.msra.mxu0 0.0
    %1212 = vmatprep.subr.mxu0 0.0
    %1213 = vmatpush1.msra.mxu0 0.0
    %1214 = vmatprep.subr.mxu0 0.0
    %1215 = vmatpush1.msra.mxu0 0.0
    %1216 = vmatprep.subr.mxu0 0.0
    %1217 = vmatpush1.msra.mxu0 0.0
    %1218 = vmatprep.subr.mxu0 0.0
    %1219 = vmatpush1.msra.mxu0 0.0
    %1220 = vmatprep.subr.mxu0 0.0
    %1221 = vmatpush1.msra.mxu0 0.0
    %1222 = vmatprep.subr.mxu0 0.0
    %1223 = vmatpush1.msra.mxu0 0.0
    %1224 = vmatprep.subr.mxu0 0.0
    %1225 = vmatpush1.msra.mxu0 0.0
    %1226 = vmatprep.subr.mxu0 0.0
    %1227 = vmatpush1.msra.mxu0 0.0
    %1228 = vmatprep.subr.mxu0 0.0
    %1229 = vmatpush1.msra.mxu0 0.0
    %1230 = vmatprep.subr.mxu0 0.0
    %1231 = vmatpush1.msra.mxu0 0.0
    %1232 = vmatprep.subr.mxu0 0.0
    %1233 = vmatpush1.msra.mxu0 0.0
    %1234 = vmatprep.subr.mxu0 0.0
    %1235 = vmatpush1.msra.mxu0 0.0
    %1236 = vmatprep.subr.mxu0 0.0
    %1237 = vmatpush1.msra.mxu0 0.0
    %1238 = vmatprep.subr.mxu0 0.0
    %1239 = vmatpush1.msra.mxu0 0.0
    %1240 = vmatprep.subr.mxu0 0.0
    %1241 = vmatpush1.msra.mxu0 0.0
    %1242 = vmatprep.subr.mxu0 0.0
    %1243 = vmatpush1.msra.mxu0 0.0
    %1244 = vmatprep.subr.mxu0 0.0
    %1245 = vmatpush1.msra.mxu0 0.0
    %1246 = vmatprep.subr.mxu0 0.0
    %1247 = vmatpush1.msra.mxu0 0.0
    %1248 = vmatprep.subr.mxu0 0.0
    %1249 = vmatpush1.msra.mxu0 0.0
    %1250 = vmatprep.subr.mxu0 0.0
    %1251 = vmatpush1.msra.mxu0 0.0
    %1252 = vmatprep.subr.mxu0 0.0
    %1253 = vmatpush1.msra.mxu0 0.0
    %1254 = vmatprep.subr.mxu0 0.0
    %1255 = vmatpush1.msra.mxu0 0.0
    %1256 = vmatprep.subr.mxu0 0.0
    %1257 = vmatpush1.msra.mxu0 0.0
    %1258 = vmatprep.subr.mxu0 0.0
    %1259 = vmatpush1.msra.mxu0 0.0
    %1260 = vmatprep.subr.mxu0 0.0
    %1261 = vmatpush1.msra.mxu0 0.0
    %1262 = vmatprep.subr.mxu0 0.0
    %1263 = vmatpush1.msra.mxu0 0.0
    %1264 = vmatprep.subr.mxu0 0.0
    %1265 = vmatpush1.msra.mxu0 0.0
    %1266 = vmatprep.mubr.f32.mxu0 0.0
    %1267 = vmatmul.mubr.f32.gmra.mrb[0].mxu0 %v632
    %v1268 = vpop.f32.mrb[0].mxu0
    %v1269 = vadd.f32 %v1198, %v1268
    %v1270 = vpop.f32.mrb[0].mxu0
    %v1271 = vadd.f32 %v1200, %v1270
    %1272 = vdwg.mxu0
    %vm1273 = vcmp.ge.f32.partialorder %v1269, 0.0
    %vm1274 = vcmp.ge.f32.partialorder %v1271, 0.0
    %v1275 = vmul.f32 %v1269, 0.01
    %v1276 = vmul.f32 %v1271, 0.01
    %v1277 = vsel %vm1273, %v1269, %v1275
    %v1278 = vsel %vm1274, %v1271, %v1276
    %v1279 = vld [vmem:[#allocation8] sm:$0x3]
    %v1281 = vlaneseq
    %v1282 = vshrl.u32 %v1281, 7
    %v1283 = vsub.s32 0, %v1282
    %v1284 = vrot.slane %v1279, %v1283
    %v1285 = vlaneseq
    %v1286 = vshrl.u32 %v1285, 7
    %v1287 = vsub.s32 1, %v1286
    %v1288 = vrot.slane %v1279, %v1287
    %v1291 = vmul.f32 %v1277, %v1284
    %v1292 = vmul.f32 %v1278, %v1288
    %v1293 = vld [vmem:[#allocation10] sm:$0x3]
    %v1295 = vlaneseq
    %v1296 = vshrl.u32 %v1295, 7
    %v1297 = vsub.s32 0, %v1296
    %v1298 = vrot.slane %v1293, %v1297
    %v1299 = vlaneseq
    %v1300 = vshrl.u32 %v1299, 7
    %v1301 = vsub.s32 1, %v1300
    %v1302 = vrot.slane %v1293, %v1301
    %v1305 = vadd.f32 %v1291, %v1298
    %v1306 = vadd.f32 %v1292, %v1302
    %1307 = vst [vmem:[#allocation11] sm:$0xff] %v1305
    %1308 = vst [vmem:[#allocation11 + $0x8] sm:$0xff] %v1306
    // Predicated region
    $region42: #{forward.1} parent=1 // pred_check
      _
    $region43: #{forward.1} parent=1 // pred_check_branch
      %1310 = sbr.rel (0) target = $region45
    $region44: #{forward.1} parent=1 // pred_region
      %s1312 = ssub.s32 256, 256
      %1313 = vsyncadd [#allocation4], %s1312
      %s1315 = sshll.u32 [#allocation11], 4
      %s1316 = int_to_ptr.vmem [resolvable:$true] %s1315
      %1318 = dma.vmem_to_hbm [thread:$0]  %s1316, 256, %s5, [#allocation4]
    $region45: #{forward.1} parent=1 // pred_fallthru
      _
    // Predicated region
    $region46: #{forward.1} parent=1 // pred_check
      _
    $region47: #{forward.1} parent=1 // pred_check_branch
      %1320 = sbr.rel (0) target = $region49
    $region48: #{forward.1} parent=1 // pred_region
      %1321 = dma.done [#allocation4], 256
    $region49: #{forward.1} parent=1 // pred_fallthru
      _
    %1322 = vsyncpa [#allocation3], 1
    %1323 = vsyncpa [#allocation6], 1
    %1324 = vsyncpa [#allocation9], 1
    %1325 = vsyncpa [#allocation4], 1

</llo_original>
